<compile_context>
chip_gen: v7x
topology: tpu7x:2x2x1
jax: 0.10.0
libtpu: 0.0.40
codegen_flags: <defaults>
</compile_context>

<pallas_src>
import functools

import jax
import jax.numpy as jnp
from jax.experimental import pallas as pl
from jax.experimental.pallas import tpu as pltpu


def _learned_softplus(x, beta, inv_beta):
    # torch: where(beta*x < 20, log1p(exp(beta*x)) / beta, x)
    bx = beta * x
    return jnp.where(bx < 20.0, jnp.log1p(jnp.exp(bx)) * inv_beta, x)


def rnn_dgm_kernel(L,
                   scal_ref,        # SMEM (2,): [beta, 1/beta]
                   xt_ref,          # (d_in+1, BN)  -- last row is ones
                   win_ref,         # (5M, d_in+1)  -- [W0|b0; Uz|bz; Ug|bg; Ur|br; Uh|bh]
                   wzgr_ref,        # (3M, M)       -- [Wz; Wg; Wr]
                   wh_ref,          # (M, M)
                   w1_ref, b1_ref,  # (M, M), (M, 1)
                   out_ref):        # (M, BN)
    dot = lambda a, b: jnp.dot(a, b, preferred_element_type=jnp.float32)

    beta = scal_ref[0]
    inv_beta = scal_ref[1]
    sp = lambda v: _learned_softplus(v, beta, inv_beta)

    M = wh_ref.shape[0]

    # One fused, loop-invariant input projection (biases folded into the MXU
    # via the ones-row of xt): rows [0:M] -> s init, [M:4M] -> z/g/r terms,
    # [4M:5M] -> h term.
    uxb = dot(win_ref[...], xt_ref[...])            # (5M, BN)
    s = sp(uxb[0:M, :])                             # (M, BN)
    uxb_zgr = uxb[M:4 * M, :]                       # (3M, BN)
    uxb_h = uxb[4 * M:5 * M, :]                     # (M, BN)

    # L is a small static depth -> unrolled at trace time.  Weight refs are
    # read inside the loop (VMEM-resident, vld slots are idle here) to keep
    # vreg pressure down across the unrolled recurrence.
    for _ in range(L):
        zgr = sp(uxb_zgr + dot(wzgr_ref[...], s))   # one dot + one softplus
        z = zgr[0 * M:1 * M, :]
        g = zgr[1 * M:2 * M, :]
        r = zgr[2 * M:3 * M, :]
        # growing=False -> A = sigma (the shared LearnedSoftPlus)
        h = sp(uxb_h + dot(wh_ref[...], s * r))
        s = (1.0 - g) * h + z * s

    out_ref[...] = dot(w1_ref[...], s) + b1_ref[...]


def _pick_block_n(N):
    # Lane-dense tiles, big enough to amortize the ~0.35us per-grid-step
    # overhead, and >=2 grid steps when possible so the "parallel" axis can
    # shard across both v7x TensorCores.  Working set is ~1.6 KB per output
    # column, so even 4096-wide tiles are trivial against VMEM.
    if N <= 128:
        return N
    bn = min(4096, N // 2)
    while N % bn != 0 and bn > 1:
        bn //= 2
    return max(bn, 1)


def rnn_encoder_like_dgm_forward(x, params, *, L=3, block_n=None):
    """x: (N, d_in) float32.  Returns (N, M) float32 (= W1(S), W1: M -> M)."""
    N, d_in = x.shape
    M = params["W0"].shape[0]           # weights stored (out, in), PyTorch layout
    if block_n is None:
        block_n = _pick_block_n(N)
    assert N % block_n == 0

    # Batch-on-lanes layout + ones-row so biases ride on the MXU (K -> d_in+1).
    xt_aug = jnp.concatenate(
        [x.T, jnp.ones((1, N), jnp.float32)], axis=0)           # (d_in+1, N)

    # Fused input projection weight: [W0; Uz; Ug; Ur; Uh] with bias column
    # [b0; bz; bg; br; bh]  (Uz/Ug/Ur/Uh are bias-free; their gate biases from
    # Wz/Wg/Wr/Wh are loop-invariant, so folding them here is exact).
    w_in = jnp.concatenate(
        [params["W0"], params["Uz"], params["Ug"], params["Ur"], params["Uh"]],
        axis=0)                                                  # (5M, d_in)
    b_in = jnp.concatenate(
        [params["b0"], params["bz"], params["bg"], params["br"], params["bh"]],
        axis=0)                                                  # (5M, 1)
    w_in_aug = jnp.concatenate([w_in, b_in], axis=1)             # (5M, d_in+1)

    # Fused recurrence gate weight: one (3M, M) dot per step instead of three.
    wzgr = jnp.concatenate(
        [params["Wz"], params["Wg"], params["Wr"]], axis=0)      # (3M, M)

    # beta / 1/beta computed once on the host-side XLA graph, read from SMEM.
    beta = jnp.exp(params["log_beta"]).astype(jnp.float32)       # (1,)
    scal = jnp.concatenate([beta, 1.0 / beta], axis=0)           # (2,)

    weight_args = [w_in_aug, wzgr, params["Wh"], params["W1"], params["b1"]]

    def resident(arr):
        # Constant index_map -> loaded once, resident in VMEM.
        return pl.BlockSpec(arr.shape, lambda i: (0, 0))

    in_specs = (
        [pl.BlockSpec(memory_space=pltpu.MemorySpace.SMEM),          # [beta, 1/beta]
         pl.BlockSpec((d_in + 1, block_n), lambda i: (0, i))]        # X^T tile
        + [resident(w) for w in weight_args]
    )
    out_spec = pl.BlockSpec((M, block_n), lambda i: (0, i))          # lane-dense

    kernel = functools.partial(rnn_dgm_kernel, L)

    out_t = pl.pallas_call(
        kernel,
        out_shape=jax.ShapeDtypeStruct((M, N), jnp.float32),
        grid_spec=pltpu.PrefetchScalarGridSpec(
            num_scalar_prefetch=0,
            grid=(N // block_n,),
            in_specs=in_specs,
            out_specs=out_spec,
        ),
        compiler_params=pltpu.CompilerParams(
            dimension_semantics=("parallel",)),
    )(scal, xt_aug, *weight_args)

    return out_t.T                                      # back to (N, M)


def init_params(key, d_in, M):
    """Deterministic synthetic init (PyTorch-Linear-like uniform fan-in scaling).

    Weights are (out_features, in_features); biases are (out_features, 1).
    """
    ks = jax.random.split(key, 20)
    it = iter(range(20))

    def lin(kw, kb, fan_in, fan_out, bias=True):
        bound = 1.0 / jnp.sqrt(float(fan_in))
        w = jax.random.uniform(kw, (fan_out, fan_in), jnp.float32, -bound, bound)
        b = (jax.random.uniform(kb, (fan_out, 1), jnp.float32, -bound, bound)
             if bias else None)
        return w, b

    p = {}
    p["W0"], p["b0"] = lin(ks[next(it)], ks[next(it)], d_in, M)
    p["Uz"], _ = lin(ks[next(it)], ks[next(it)], d_in, M, bias=False)
    p["Ug"], _ = lin(ks[next(it)], ks[next(it)], d_in, M, bias=False)
    p["Ur"], _ = lin(ks[next(it)], ks[next(it)], d_in, M, bias=False)
    p["Uh"], _ = lin(ks[next(it)], ks[next(it)], d_in, M, bias=False)
    p["Wz"], p["bz"] = lin(ks[next(it)], ks[next(it)], M, M)
    p["Wg"], p["bg"] = lin(ks[next(it)], ks[next(it)], M, M)
    p["Wr"], p["br"] = lin(ks[next(it)], ks[next(it)], M, M)
    p["Wh"], p["bh"] = lin(ks[next(it)], ks[next(it)], M, M)
    p["W1"], p["b1"] = lin(ks[next(it)], ks[next(it)], M, M)     # W1: M -> M
    # LearnedSoftPlus: log_beta = log(init_beta=1.0) = 0.0
    p["log_beta"] = jnp.zeros((1,), jnp.float32)
    return p


def reference_forward(x, params, *, L=3):
    """Pure-JAX reference mirroring the PyTorch module line by line."""
    beta = jnp.exp(params["log_beta"][0])
    inv_beta = 1.0 / beta
    sp = lambda v: _learned_softplus(v, beta, inv_beta)
    lin = lambda a, W, b=None: a @ W.T + (0.0 if b is None else b[:, 0])

    s = sp(lin(x, params["W0"], params["b0"]))
    for _ in range(L):
        z = sp(lin(x, params["Uz"]) + lin(s, params["Wz"], params["bz"]))
        g = sp(lin(x, params["Ug"]) + lin(s, params["Wg"], params["bg"]))
        r = sp(lin(x, params["Ur"]) + lin(s, params["Wr"], params["br"]))
        h = sp(lin(x, params["Uh"]) + lin(s * r, params["Wh"], params["bh"]))
        s = (1.0 - g) * h + z * s
    return lin(s, params["W1"], params["b1"])


if __name__ == "__main__":
    d_in, M, L = 4, 32, 3
    N = 256           # batch; default block_n picker -> 128-wide tiles, grid=2

    key = jax.random.PRNGKey(0)
    k_param, k_x = jax.random.split(key)
    params = init_params(k_param, d_in, M)
    x = jax.random.normal(k_x, (N, d_in), jnp.float32)

    out = rnn_encoder_like_dgm_forward(x, params, L=L)
    out = jax.block_until_ready(out)

    ref = reference_forward(x, params, L=L)
    assert out.shape == (N, M)
    assert jnp.allclose(out, ref, atol=1e-4, rtol=1e-4), (
        f"max abs err {jnp.max(jnp.abs(out - ref))}")

    print("KERNEL_OK")
</pallas_src>

<mosaic_0001>
module attributes {stable_mosaic.version = 11 : i64} {
  func.func @rnn_dgm_kernel(%arg0: i32, %arg1: memref<2xf32, #tpu.memory_space<smem>>, %arg2: memref<5x128xf32, #tpu.memory_space<vmem>>, %arg3: memref<160x5xf32, #tpu.memory_space<vmem>>, %arg4: memref<96x32xf32, #tpu.memory_space<vmem>>, %arg5: memref<32x32xf32, #tpu.memory_space<vmem>>, %arg6: memref<32x32xf32, #tpu.memory_space<vmem>>, %arg7: memref<32x1xf32, #tpu.memory_space<vmem>>, %arg8: memref<32x128xf32, #tpu.memory_space<vmem>>) attributes {dimension_semantics = [#tpu.dimension_semantics<parallel>], iteration_bounds = array<i64: 2>, scalar_prefetch = 0 : i64, scratch_operands = 0 : i64, tpu.core_type = #tpu.core_type<tc>, window_params = [{transform_indices = @transform_0, window_bounds = array<i64: 2>}, {transform_indices = @transform_1, window_bounds = array<i64: 5, 128>}, {pipeline_mode = #tpu.pipeline_mode<synchronous>, transform_indices = @transform_2, window_bounds = array<i64: 160, 5>}, {pipeline_mode = #tpu.pipeline_mode<synchronous>, transform_indices = @transform_3, window_bounds = array<i64: 96, 32>}, {pipeline_mode = #tpu.pipeline_mode<synchronous>, transform_indices = @transform_4, window_bounds = array<i64: 32, 32>}, {pipeline_mode = #tpu.pipeline_mode<synchronous>, transform_indices = @transform_5, window_bounds = array<i64: 32, 32>}, {pipeline_mode = #tpu.pipeline_mode<synchronous>, transform_indices = @transform_6, window_bounds = array<i64: 32, 1>}, {transform_indices = @transform_7, window_bounds = array<i64: 32, 128>}]} {
    %c0 = arith.constant 0 : index
    %0 = memref.load %arg1[%c0] : memref<2xf32, #tpu.memory_space<smem>>
    %c1 = arith.constant 1 : index
    %1 = memref.load %arg1[%c1] : memref<2xf32, #tpu.memory_space<smem>>
    %c0_0 = arith.constant 0 : index
    %c0_1 = arith.constant 0 : index
    %2 = vector.load %arg3[%c0_0, %c0_1] : memref<160x5xf32, #tpu.memory_space<vmem>>, vector<160x5xf32>
    %c0_2 = arith.constant 0 : index
    %c0_3 = arith.constant 0 : index
    %3 = vector.load %arg2[%c0_2, %c0_3] : memref<5x128xf32, #tpu.memory_space<vmem>>, vector<5x128xf32>
    %cst = arith.constant dense<0.000000e+00> : vector<160x128xf32>
    %4 = tpu.matmul %2, %3, %cst {dimension_numbers = #tpu.dot_dimension_numbers<[1], [0], [0], [1], [0, 0, 1, 1], [], []>} : vector<160x5xf32>, vector<5x128xf32>, vector<160x128xf32> -> vector<160x128xf32>
    %5 = vector.extract_strided_slice %4 {offsets = [0, 0], sizes = [32, 128], strides = [1, 1]} : vector<160x128xf32> to vector<32x128xf32>
    %6 = vector.broadcast %0 : f32 to vector<32x128xf32>
    %7 = arith.mulf %6, %5 : vector<32x128xf32>
    %cst_4 = arith.constant 2.000000e+01 : f32
    %8 = vector.broadcast %cst_4 : f32 to vector<32x128xf32>
    %9 = arith.cmpf olt, %7, %8 : vector<32x128xf32>
    %10 = math.exp %7 : vector<32x128xf32>
    %11 = math.log1p %10 : vector<32x128xf32>
    %12 = vector.broadcast %1 : f32 to vector<32x128xf32>
    %13 = arith.mulf %11, %12 : vector<32x128xf32>
    %14 = arith.select %9, %13, %5 : vector<32x128xi1>, vector<32x128xf32>
    %15 = vector.extract_strided_slice %4 {offsets = [32, 0], sizes = [96, 128], strides = [1, 1]} : vector<160x128xf32> to vector<96x128xf32>
    %16 = vector.extract_strided_slice %4 {offsets = [128, 0], sizes = [32, 128], strides = [1, 1]} : vector<160x128xf32> to vector<32x128xf32>
    %c0_5 = arith.constant 0 : index
    %c0_6 = arith.constant 0 : index
    %17 = vector.load %arg4[%c0_5, %c0_6] : memref<96x32xf32, #tpu.memory_space<vmem>>, vector<96x32xf32>
    %cst_7 = arith.constant dense<0.000000e+00> : vector<96x128xf32>
    %18 = tpu.matmul %17, %14, %cst_7 {dimension_numbers = #tpu.dot_dimension_numbers<[1], [0], [0], [1], [0, 0, 1, 1], [], []>} : vector<96x32xf32>, vector<32x128xf32>, vector<96x128xf32> -> vector<96x128xf32>
    %19 = arith.addf %15, %18 : vector<96x128xf32>
    %20 = vector.broadcast %0 : f32 to vector<96x128xf32>
    %21 = arith.mulf %20, %19 : vector<96x128xf32>
    %cst_8 = arith.constant 2.000000e+01 : f32
    %22 = vector.broadcast %cst_8 : f32 to vector<96x128xf32>
    %23 = arith.cmpf olt, %21, %22 : vector<96x128xf32>
    %24 = math.exp %21 : vector<96x128xf32>
    %25 = math.log1p %24 : vector<96x128xf32>
    %26 = vector.broadcast %1 : f32 to vector<96x128xf32>
    %27 = arith.mulf %25, %26 : vector<96x128xf32>
    %28 = arith.select %23, %27, %19 : vector<96x128xi1>, vector<96x128xf32>
    %29 = vector.extract_strided_slice %28 {offsets = [0, 0], sizes = [32, 128], strides = [1, 1]} : vector<96x128xf32> to vector<32x128xf32>
    %30 = vector.extract_strided_slice %28 {offsets = [32, 0], sizes = [32, 128], strides = [1, 1]} : vector<96x128xf32> to vector<32x128xf32>
    %31 = vector.extract_strided_slice %28 {offsets = [64, 0], sizes = [32, 128], strides = [1, 1]} : vector<96x128xf32> to vector<32x128xf32>
    %c0_9 = arith.constant 0 : index
    %c0_10 = arith.constant 0 : index
    %32 = vector.load %arg5[%c0_9, %c0_10] : memref<32x32xf32, #tpu.memory_space<vmem>>, vector<32x32xf32>
    %33 = arith.mulf %14, %31 : vector<32x128xf32>
    %cst_11 = arith.constant dense<0.000000e+00> : vector<32x128xf32>
    %34 = tpu.matmul %32, %33, %cst_11 {dimension_numbers = #tpu.dot_dimension_numbers<[1], [0], [0], [1], [0, 0, 1, 1], [], []>} : vector<32x32xf32>, vector<32x128xf32>, vector<32x128xf32> -> vector<32x128xf32>
    %35 = arith.addf %16, %34 : vector<32x128xf32>
    %36 = vector.broadcast %0 : f32 to vector<32x128xf32>
    %37 = arith.mulf %36, %35 : vector<32x128xf32>
    %cst_12 = arith.constant 2.000000e+01 : f32
    %38 = vector.broadcast %cst_12 : f32 to vector<32x128xf32>
    %39 = arith.cmpf olt, %37, %38 : vector<32x128xf32>
    %40 = math.exp %37 : vector<32x128xf32>
    %41 = math.log1p %40 : vector<32x128xf32>
    %42 = vector.broadcast %1 : f32 to vector<32x128xf32>
    %43 = arith.mulf %41, %42 : vector<32x128xf32>
    %44 = arith.select %39, %43, %35 : vector<32x128xi1>, vector<32x128xf32>
    %cst_13 = arith.constant 1.000000e+00 : f32
    %45 = vector.broadcast %cst_13 : f32 to vector<32x128xf32>
    %46 = arith.subf %45, %30 : vector<32x128xf32>
    %47 = arith.mulf %46, %44 : vector<32x128xf32>
    %48 = arith.mulf %29, %14 : vector<32x128xf32>
    %49 = arith.addf %47, %48 : vector<32x128xf32>
    %c0_14 = arith.constant 0 : index
    %c0_15 = arith.constant 0 : index
    %50 = vector.load %arg4[%c0_14, %c0_15] : memref<96x32xf32, #tpu.memory_space<vmem>>, vector<96x32xf32>
    %cst_16 = arith.constant dense<0.000000e+00> : vector<96x128xf32>
    %51 = tpu.matmul %50, %49, %cst_16 {dimension_numbers = #tpu.dot_dimension_numbers<[1], [0], [0], [1], [0, 0, 1, 1], [], []>} : vector<96x32xf32>, vector<32x128xf32>, vector<96x128xf32> -> vector<96x128xf32>
    %52 = arith.addf %15, %51 : vector<96x128xf32>
    %53 = vector.broadcast %0 : f32 to vector<96x128xf32>
    %54 = arith.mulf %53, %52 : vector<96x128xf32>
    %cst_17 = arith.constant 2.000000e+01 : f32
    %55 = vector.broadcast %cst_17 : f32 to vector<96x128xf32>
    %56 = arith.cmpf olt, %54, %55 : vector<96x128xf32>
    %57 = math.exp %54 : vector<96x128xf32>
    %58 = math.log1p %57 : vector<96x128xf32>
    %59 = vector.broadcast %1 : f32 to vector<96x128xf32>
    %60 = arith.mulf %58, %59 : vector<96x128xf32>
    %61 = arith.select %56, %60, %52 : vector<96x128xi1>, vector<96x128xf32>
    %62 = vector.extract_strided_slice %61 {offsets = [0, 0], sizes = [32, 128], strides = [1, 1]} : vector<96x128xf32> to vector<32x128xf32>
    %63 = vector.extract_strided_slice %61 {offsets = [32, 0], sizes = [32, 128], strides = [1, 1]} : vector<96x128xf32> to vector<32x128xf32>
    %64 = vector.extract_strided_slice %61 {offsets = [64, 0], sizes = [32, 128], strides = [1, 1]} : vector<96x128xf32> to vector<32x128xf32>
    %c0_18 = arith.constant 0 : index
    %c0_19 = arith.constant 0 : index
    %65 = vector.load %arg5[%c0_18, %c0_19] : memref<32x32xf32, #tpu.memory_space<vmem>>, vector<32x32xf32>
    %66 = arith.mulf %49, %64 : vector<32x128xf32>
    %cst_20 = arith.constant dense<0.000000e+00> : vector<32x128xf32>
    %67 = tpu.matmul %65, %66, %cst_20 {dimension_numbers = #tpu.dot_dimension_numbers<[1], [0], [0], [1], [0, 0, 1, 1], [], []>} : vector<32x32xf32>, vector<32x128xf32>, vector<32x128xf32> -> vector<32x128xf32>
    %68 = arith.addf %16, %67 : vector<32x128xf32>
    %69 = vector.broadcast %0 : f32 to vector<32x128xf32>
    %70 = arith.mulf %69, %68 : vector<32x128xf32>
    %cst_21 = arith.constant 2.000000e+01 : f32
    %71 = vector.broadcast %cst_21 : f32 to vector<32x128xf32>
    %72 = arith.cmpf olt, %70, %71 : vector<32x128xf32>
    %73 = math.exp %70 : vector<32x128xf32>
    %74 = math.log1p %73 : vector<32x128xf32>
    %75 = vector.broadcast %1 : f32 to vector<32x128xf32>
    %76 = arith.mulf %74, %75 : vector<32x128xf32>
    %77 = arith.select %72, %76, %68 : vector<32x128xi1>, vector<32x128xf32>
    %cst_22 = arith.constant 1.000000e+00 : f32
    %78 = vector.broadcast %cst_22 : f32 to vector<32x128xf32>
    %79 = arith.subf %78, %63 : vector<32x128xf32>
    %80 = arith.mulf %79, %77 : vector<32x128xf32>
    %81 = arith.mulf %62, %49 : vector<32x128xf32>
    %82 = arith.addf %80, %81 : vector<32x128xf32>
    %c0_23 = arith.constant 0 : index
    %c0_24 = arith.constant 0 : index
    %83 = vector.load %arg4[%c0_23, %c0_24] : memref<96x32xf32, #tpu.memory_space<vmem>>, vector<96x32xf32>
    %cst_25 = arith.constant dense<0.000000e+00> : vector<96x128xf32>
    %84 = tpu.matmul %83, %82, %cst_25 {dimension_numbers = #tpu.dot_dimension_numbers<[1], [0], [0], [1], [0, 0, 1, 1], [], []>} : vector<96x32xf32>, vector<32x128xf32>, vector<96x128xf32> -> vector<96x128xf32>
    %85 = arith.addf %15, %84 : vector<96x128xf32>
    %86 = vector.broadcast %0 : f32 to vector<96x128xf32>
    %87 = arith.mulf %86, %85 : vector<96x128xf32>
    %cst_26 = arith.constant 2.000000e+01 : f32
    %88 = vector.broadcast %cst_26 : f32 to vector<96x128xf32>
    %89 = arith.cmpf olt, %87, %88 : vector<96x128xf32>
    %90 = math.exp %87 : vector<96x128xf32>
    %91 = math.log1p %90 : vector<96x128xf32>
    %92 = vector.broadcast %1 : f32 to vector<96x128xf32>
    %93 = arith.mulf %91, %92 : vector<96x128xf32>
    %94 = arith.select %89, %93, %85 : vector<96x128xi1>, vector<96x128xf32>
    %95 = vector.extract_strided_slice %94 {offsets = [0, 0], sizes = [32, 128], strides = [1, 1]} : vector<96x128xf32> to vector<32x128xf32>
    %96 = vector.extract_strided_slice %94 {offsets = [32, 0], sizes = [32, 128], strides = [1, 1]} : vector<96x128xf32> to vector<32x128xf32>
    %97 = vector.extract_strided_slice %94 {offsets = [64, 0], sizes = [32, 128], strides = [1, 1]} : vector<96x128xf32> to vector<32x128xf32>
    %c0_27 = arith.constant 0 : index
    %c0_28 = arith.constant 0 : index
    %98 = vector.load %arg5[%c0_27, %c0_28] : memref<32x32xf32, #tpu.memory_space<vmem>>, vector<32x32xf32>
    %99 = arith.mulf %82, %97 : vector<32x128xf32>
    %cst_29 = arith.constant dense<0.000000e+00> : vector<32x128xf32>
    %100 = tpu.matmul %98, %99, %cst_29 {dimension_numbers = #tpu.dot_dimension_numbers<[1], [0], [0], [1], [0, 0, 1, 1], [], []>} : vector<32x32xf32>, vector<32x128xf32>, vector<32x128xf32> -> vector<32x128xf32>
    %101 = arith.addf %16, %100 : vector<32x128xf32>
    %102 = vector.broadcast %0 : f32 to vector<32x128xf32>
    %103 = arith.mulf %102, %101 : vector<32x128xf32>
    %cst_30 = arith.constant 2.000000e+01 : f32
    %104 = vector.broadcast %cst_30 : f32 to vector<32x128xf32>
    %105 = arith.cmpf olt, %103, %104 : vector<32x128xf32>
    %106 = math.exp %103 : vector<32x128xf32>
    %107 = math.log1p %106 : vector<32x128xf32>
    %108 = vector.broadcast %1 : f32 to vector<32x128xf32>
    %109 = arith.mulf %107, %108 : vector<32x128xf32>
    %110 = arith.select %105, %109, %101 : vector<32x128xi1>, vector<32x128xf32>
    %cst_31 = arith.constant 1.000000e+00 : f32
    %111 = vector.broadcast %cst_31 : f32 to vector<32x128xf32>
    %112 = arith.subf %111, %96 : vector<32x128xf32>
    %113 = arith.mulf %112, %110 : vector<32x128xf32>
    %114 = arith.mulf %95, %82 : vector<32x128xf32>
    %115 = arith.addf %113, %114 : vector<32x128xf32>
    %c0_32 = arith.constant 0 : index
    %c0_33 = arith.constant 0 : index
    %116 = vector.load %arg6[%c0_32, %c0_33] : memref<32x32xf32, #tpu.memory_space<vmem>>, vector<32x32xf32>
    %cst_34 = arith.constant dense<0.000000e+00> : vector<32x128xf32>
    %117 = tpu.matmul %116, %115, %cst_34 {dimension_numbers = #tpu.dot_dimension_numbers<[1], [0], [0], [1], [0, 0, 1, 1], [], []>} : vector<32x32xf32>, vector<32x128xf32>, vector<32x128xf32> -> vector<32x128xf32>
    %c0_35 = arith.constant 0 : index
    %c0_36 = arith.constant 0 : index
    %118 = vector.load %arg7[%c0_35, %c0_36] : memref<32x1xf32, #tpu.memory_space<vmem>>, vector<32x1xf32>
    %119 = vector.broadcast %118 : vector<32x1xf32> to vector<32x128xf32>
    %120 = arith.addf %117, %119 : vector<32x128xf32>
    %c0_37 = arith.constant 0 : index
    %c0_38 = arith.constant 0 : index
    %121 = vector.load %arg8[%c0_37, %c0_38] : memref<32x128xf32, #tpu.memory_space<vmem>>, vector<32x128xf32>
    tpu.vector_store %arg8[%c0_37, %c0_38], %120 {strides = array<i32>} : memref<32x128xf32, #tpu.memory_space<vmem>>, vector<32x128xf32>,
    return
  }
  func.func @transform_0(%arg0: i32) -> i32 {
    %c0_i32 = arith.constant 0 : i32
    %c0_i32_0 = arith.constant 0 : i32
    return %c0_i32 : i32
  }
  func.func @transform_1(%arg0: i32) -> (i32, i32) {
    %c0_i32 = arith.constant 0 : i32
    %c0_i32_0 = arith.constant 0 : i32
    return %c0_i32, %arg0 : i32, i32
  }
  func.func @transform_2(%arg0: i32) -> (i32, i32) {
    %c0_i32 = arith.constant 0 : i32
    %c0_i32_0 = arith.constant 0 : i32
    %c0_i32_1 = arith.constant 0 : i32
    return %c0_i32, %c0_i32_0 : i32, i32
  }
  func.func @transform_3(%arg0: i32) -> (i32, i32) {
    %c0_i32 = arith.constant 0 : i32
    %c0_i32_0 = arith.constant 0 : i32
    %c0_i32_1 = arith.constant 0 : i32
    return %c0_i32, %c0_i32_0 : i32, i32
  }
  func.func @transform_4(%arg0: i32) -> (i32, i32) {
    %c0_i32 = arith.constant 0 : i32
    %c0_i32_0 = arith.constant 0 : i32
    %c0_i32_1 = arith.constant 0 : i32
    return %c0_i32, %c0_i32_0 : i32, i32
  }
  func.func @transform_5(%arg0: i32) -> (i32, i32) {
    %c0_i32 = arith.constant 0 : i32
    %c0_i32_0 = arith.constant 0 : i32
    %c0_i32_1 = arith.constant 0 : i32
    return %c0_i32, %c0_i32_0 : i32, i32
  }
  func.func @transform_6(%arg0: i32) -> (i32, i32) {
    %c0_i32 = arith.constant 0 : i32
    %c0_i32_0 = arith.constant 0 : i32
    %c0_i32_1 = arith.constant 0 : i32
    return %c0_i32, %c0_i32_0 : i32, i32
  }
  func.func @transform_7(%arg0: i32) -> (i32, i32) {
    %c0_i32 = arith.constant 0 : i32
    %c0_i32_0 = arith.constant 0 : i32
    return %c0_i32, %arg0 : i32, i32
  }
}

</mosaic_0001>

<llo_original>
// kernel: tpu_custom_call.1
$region0: #{tpu_custom_call.1}
  #allocation0 [shape = 'u32[]', space=smem, size = 0x4, offset = 0x4, fixed_abs, tag = 'smem constant byte address 0x4 - core index']
  #allocation1 [shape = 'u32[144,128]{1,0:T(1,128)}', space=vmem, size = 0x12000, scoped, tag = 'internal scratch']
  %s0 = inlined_call_operand.vmem [shape: f32[2], index: 0, kind: input, shape index: {}]
  %s1 = inlined_call_operand.vmem [shape: f32[5,256], index: 1, kind: input, shape index: {}]
  %s2 = inlined_call_operand.vmem [shape: f32[160,5], index: 2, kind: input, shape index: {}]
  %s3 = inlined_call_operand.vmem [shape: f32[96,32], index: 3, kind: input, shape index: {}]
  %s4 = inlined_call_operand.vmem [shape: f32[32,32], index: 4, kind: input, shape index: {}]
  %s5 = inlined_call_operand.vmem [shape: f32[32,32], index: 5, kind: input, shape index: {}]
  %s6 = inlined_call_operand.vmem [shape: f32[32,1], index: 6, kind: input, shape index: {}]
  %s7 = inlined_call_operand.hbm [shape: f32[32,256], index: 7, kind: output, shape index: {}]
  %s8 = sld [smem:[#allocation0]]
  $region65: #{tpu_custom_call.1} parent=0
    _
  %s10 = ssub.s32 1, %s8
  %s11 = scalar_select 0, %s10, %s8
  $region1: #{tpu_custom_call.1} parent=0
    #allocation2 [shape = 'u8[512]{0}', space=smem, size = 0x200, scoped, tag = 'input window, operand 0, single buffered']
    #allocation3 [shape = 's32[2]{0}', space=sflag, size = 0x8, scoped, tag = 'scoped memory for tpu_custom_call.1']
    #allocation4 [shape = 's32[2]{0}', space=sflag, size = 0x8, scoped, tag = 'scoped memory for tpu_custom_call.1']
    #allocation5 [shape = 'u8[32768]{0}', space=vmem, size = 0x8000, scoped, tag = 'output window, operand 0']
    %12 = vsyncpa [#allocation4], 0
    %13 = vsyncpa [#allocation3], 0
    %s14 = scalar_lea.sflag [#allocation3], 1
    %15 = vsyncpa %s14, 0
    loop: start=0, step=1, limit=4
    $region2: #{tpu_custom_call.1} parent=1 // loop_pre_header
      _
    $region3: #{tpu_custom_call.1} parent=1 // loop_header
      %s17 = sphi 0, %s21
      %p18 = scmp.ge.s32.totalorder %s17, 4
      %s25 = sphi 0, %s25
      %s27 = sphi 0, %s25
      %s28 = sphi 0, %s27
      %s42 = sphi 0, %s28
      %s48 = sphi 0, %s50
      %s51 = sphi 0, %s48
      %s52 = sphi 0, %s51
      %s68 = sphi 0, %s52
      %s72 = sphi 0, %s72
      %s74 = sphi 0, %s72
      %s75 = sphi 0, %s74
      %s89 = sphi 0, %s75
      %s93 = sphi 0, %s93
      %s95 = sphi 0, %s93
      %s96 = sphi 0, %s95
      %s110 = sphi 0, %s96
      %s114 = sphi 0, %s114
      %s116 = sphi 0, %s114
      %s117 = sphi 0, %s116
      %s131 = sphi 0, %s117
      %s135 = sphi 0, %s135
      %s137 = sphi 0, %s135
      %s138 = sphi 0, %s137
      %s152 = sphi 0, %s138
      %s156 = sphi 0, %s156
      %s158 = sphi 0, %s156
      %s159 = sphi 0, %s158
      %s173 = sphi 0, %s159
      %s179 = sphi 0, %s181
      %s182 = sphi 0, %s179
      %s183 = sphi 0, %s182
      %s199 = sphi 0, %s183
    $region4: #{tpu_custom_call.1} parent=1 // loop_header_branch
      %20 = sbr.rel (%p18) target = $region8
    $region5: #{tpu_custom_call.1} parent=1 // loop_body
      %s22 = ssub.s32 %s17, 1
      %s23 = ssub.s32 %s17, 2
      %s24 = sadd.s32 %s17, 1
      %s26 = sadd.s32 %s25, 1
      %p29 = scmp.eq.s32.totalorder %s17, 1
      %p30 = scmp.ne.s32.totalorder %s25, %s27
      %p31 = scmp.eq.s32.totalorder %s17, 0
      %p32 = por %p30, %p31
      %p33 = scmp.ne.s32.totalorder %s25, %s27
      %p34 = scmp.eq.s32.totalorder %s22, 1
      %p35 = por %p33, %p34
      %p36 = scmp.ne.s32.totalorder %s27, %s28
      %p37 = scmp.eq.s32.totalorder %s22, 0
      %p38 = por %p36, %p37
      %p39 = scmp.ne.s32.totalorder %s27, %s28
      %p40 = scmp.eq.s32.totalorder %s23, 1
      %p41 = por %p39, %p40
      %p43 = scmp.ne.s32.totalorder %s28, %s42
      %p44 = scmp.eq.s32.totalorder %s23, 0
      %p45 = por %p43, %p44
      %s46 = ssub.s32 %s17, %s24
      %p47 = scmp.eq.s32.totalorder %s46, 0
      %s49 = sadd.s32 %s48, 1
      %s50 = scalar_select %p47, %s48, %s49
      %p53 = pneg %p47
      %p54 = scmp.eq.s32.totalorder %s17, 1
      %p55 = por %p53, %p54
      %p56 = scmp.ne.s32.totalorder %s48, %s51
      %p57 = scmp.eq.s32.totalorder %s17, 0
      %p58 = por %p56, %p57
      %p59 = scmp.ne.s32.totalorder %s48, %s51
      %p60 = scmp.eq.s32.totalorder %s22, 1
      %p61 = por %p59, %p60
      %p62 = scmp.ne.s32.totalorder %s51, %s52
      %p63 = scmp.eq.s32.totalorder %s22, 0
      %p64 = por %p62, %p63
      %p65 = scmp.ne.s32.totalorder %s51, %s52
      %p66 = scmp.eq.s32.totalorder %s23, 1
      %p67 = por %p65, %p66
      %p69 = scmp.ne.s32.totalorder %s52, %s68
      %p70 = scmp.eq.s32.totalorder %s23, 0
      %p71 = por %p69, %p70
      %s73 = sadd.s32 %s72, 1
      %p76 = scmp.eq.s32.totalorder %s17, 1
      %p77 = scmp.ne.s32.totalorder %s72, %s74
      %p78 = scmp.eq.s32.totalorder %s17, 0
      %p79 = por %p77, %p78
      %p80 = scmp.ne.s32.totalorder %s72, %s74
      %p81 = scmp.eq.s32.totalorder %s22, 1
      %p82 = por %p80, %p81
      %p83 = scmp.ne.s32.totalorder %s74, %s75
      %p84 = scmp.eq.s32.totalorder %s22, 0
      %p85 = por %p83, %p84
      %p86 = scmp.ne.s32.totalorder %s74, %s75
      %p87 = scmp.eq.s32.totalorder %s23, 1
      %p88 = por %p86, %p87
      %p90 = scmp.ne.s32.totalorder %s75, %s89
      %p91 = scmp.eq.s32.totalorder %s23, 0
      %p92 = por %p90, %p91
      %s94 = sadd.s32 %s93, 1
      %p97 = scmp.eq.s32.totalorder %s17, 1
      %p98 = scmp.ne.s32.totalorder %s93, %s95
      %p99 = scmp.eq.s32.totalorder %s17, 0
      %p100 = por %p98, %p99
      %p101 = scmp.ne.s32.totalorder %s93, %s95
      %p102 = scmp.eq.s32.totalorder %s22, 1
      %p103 = por %p101, %p102
      %p104 = scmp.ne.s32.totalorder %s95, %s96
      %p105 = scmp.eq.s32.totalorder %s22, 0
      %p106 = por %p104, %p105
      %p107 = scmp.ne.s32.totalorder %s95, %s96
      %p108 = scmp.eq.s32.totalorder %s23, 1
      %p109 = por %p107, %p108
      %p111 = scmp.ne.s32.totalorder %s96, %s110
      %p112 = scmp.eq.s32.totalorder %s23, 0
      %p113 = por %p111, %p112
      %s115 = sadd.s32 %s114, 1
      %p118 = scmp.eq.s32.totalorder %s17, 1
      %p119 = scmp.ne.s32.totalorder %s114, %s116
      %p120 = scmp.eq.s32.totalorder %s17, 0
      %p121 = por %p119, %p120
      %p122 = scmp.ne.s32.totalorder %s114, %s116
      %p123 = scmp.eq.s32.totalorder %s22, 1
      %p124 = por %p122, %p123
      %p125 = scmp.ne.s32.totalorder %s116, %s117
      %p126 = scmp.eq.s32.totalorder %s22, 0
      %p127 = por %p125, %p126
      %p128 = scmp.ne.s32.totalorder %s116, %s117
      %p129 = scmp.eq.s32.totalorder %s23, 1
      %p130 = por %p128, %p129
      %p132 = scmp.ne.s32.totalorder %s117, %s131
      %p133 = scmp.eq.s32.totalorder %s23, 0
      %p134 = por %p132, %p133
      %s136 = sadd.s32 %s135, 1
      %p139 = scmp.eq.s32.totalorder %s17, 1
      %p140 = scmp.ne.s32.totalorder %s135, %s137
      %p141 = scmp.eq.s32.totalorder %s17, 0
      %p142 = por %p140, %p141
      %p143 = scmp.ne.s32.totalorder %s135, %s137
      %p144 = scmp.eq.s32.totalorder %s22, 1
      %p145 = por %p143, %p144
      %p146 = scmp.ne.s32.totalorder %s137, %s138
      %p147 = scmp.eq.s32.totalorder %s22, 0
      %p148 = por %p146, %p147
      %p149 = scmp.ne.s32.totalorder %s137, %s138
      %p150 = scmp.eq.s32.totalorder %s23, 1
      %p151 = por %p149, %p150
      %p153 = scmp.ne.s32.totalorder %s138, %s152
      %p154 = scmp.eq.s32.totalorder %s23, 0
      %p155 = por %p153, %p154
      %s157 = sadd.s32 %s156, 1
      %p160 = scmp.eq.s32.totalorder %s17, 1
      %p161 = scmp.ne.s32.totalorder %s156, %s158
      %p162 = scmp.eq.s32.totalorder %s17, 0
      %p163 = por %p161, %p162
      %p164 = scmp.ne.s32.totalorder %s156, %s158
      %p165 = scmp.eq.s32.totalorder %s22, 1
      %p166 = por %p164, %p165
      %p167 = scmp.ne.s32.totalorder %s158, %s159
      %p168 = scmp.eq.s32.totalorder %s22, 0
      %p169 = por %p167, %p168
      %p170 = scmp.ne.s32.totalorder %s158, %s159
      %p171 = scmp.eq.s32.totalorder %s23, 1
      %p172 = por %p170, %p171
      %p174 = scmp.ne.s32.totalorder %s159, %s173
      %p175 = scmp.eq.s32.totalorder %s23, 0
      %p176 = por %p174, %p175
      %s177 = ssub.s32 %s17, %s24
      %p178 = scmp.eq.s32.totalorder %s177, 0
      %s180 = sadd.s32 %s179, 1
      %s181 = scalar_select %p178, %s179, %s180
      %p184 = pneg %p178
      %p185 = scmp.eq.s32.totalorder %s17, 1
      %p186 = por %p184, %p185
      %p187 = scmp.ne.s32.totalorder %s179, %s182
      %p188 = scmp.eq.s32.totalorder %s17, 0
      %p189 = por %p187, %p188
      %p190 = scmp.ne.s32.totalorder %s179, %s182
      %p191 = scmp.eq.s32.totalorder %s22, 1
      %p192 = por %p190, %p191
      %p193 = scmp.ne.s32.totalorder %s182, %s183
      %p194 = scmp.eq.s32.totalorder %s22, 0
      %p195 = por %p193, %p194
      %p196 = scmp.ne.s32.totalorder %s182, %s183
      %p197 = scmp.eq.s32.totalorder %s23, 1
      %p198 = por %p196, %p197
      %p200 = scmp.ne.s32.totalorder %s183, %s199
      %p201 = scmp.eq.s32.totalorder %s23, 0
      %p202 = por %p200, %p201
      %p203 = scmp.le.s32.totalorder 1, %s17
      %p204 = scmp.lt.s32.totalorder %s17, 3
      %p205 = pnand %p203, %p204
      %p206 = pneg %p205
      // Predicated region
      $region9: #{tpu_custom_call.1} parent=5 // pred_check
        _
      $region10: #{tpu_custom_call.1} parent=5 // pred_check_branch
        %208 = sbr.rel (%p205) target = $region12
      $region11: #{tpu_custom_call.1} parent=5 // pred_region
        %s209 = ssub.s32 %s17, 1
        // Predicated region
        $region13: #{tpu_custom_call.1} parent=11 // pred_check
          %p210 = pneg %p38
        $region14: #{tpu_custom_call.1} parent=11 // pred_check_branch
          %212 = sbr.rel (%p210) target = $region16
        $region15: #{tpu_custom_call.1} parent=11 // pred_region
          %s214 = ssub.s32 16, 16
          %215 = vsyncadd [#allocation4], %s214
          %s217 = sshll.u32 %s0, 4
          %s218 = int_to_ptr.vmem [resolvable:$true] %s217
          %220 = dma.vmem_to_smem %s218, 16, [#allocation2], [#allocation4]
        $region16: #{tpu_custom_call.1} parent=11 // pred_fallthru
          _
        // Predicated region
        $region17: #{tpu_custom_call.1} parent=11 // pred_check
          %p221 = pneg %p85
        $region18: #{tpu_custom_call.1} parent=11 // pred_check_branch
          %223 = sbr.rel (%p221) target = $region20
        $region19: #{tpu_custom_call.1} parent=11 // pred_region
          _
        $region20: #{tpu_custom_call.1} parent=11 // pred_fallthru
          _
        // Predicated region
        $region21: #{tpu_custom_call.1} parent=11 // pred_check
          %p224 = pneg %p106
        $region22: #{tpu_custom_call.1} parent=11 // pred_check_branch
          %226 = sbr.rel (%p224) target = $region24
        $region23: #{tpu_custom_call.1} parent=11 // pred_region
          _
        $region24: #{tpu_custom_call.1} parent=11 // pred_fallthru
          _
        // Predicated region
        $region25: #{tpu_custom_call.1} parent=11 // pred_check
          %p227 = pneg %p127
        $region26: #{tpu_custom_call.1} parent=11 // pred_check_branch
          %229 = sbr.rel (%p227) target = $region28
        $region27: #{tpu_custom_call.1} parent=11 // pred_region
          _
        $region28: #{tpu_custom_call.1} parent=11 // pred_fallthru
          _
        // Predicated region
        $region29: #{tpu_custom_call.1} parent=11 // pred_check
          %p230 = pneg %p148
        $region30: #{tpu_custom_call.1} parent=11 // pred_check_branch
          %232 = sbr.rel (%p230) target = $region32
        $region31: #{tpu_custom_call.1} parent=11 // pred_region
          _
        $region32: #{tpu_custom_call.1} parent=11 // pred_fallthru
          _
        // Predicated region
        $region33: #{tpu_custom_call.1} parent=11 // pred_check
          %p233 = pneg %p169
        $region34: #{tpu_custom_call.1} parent=11 // pred_check_branch
          %235 = sbr.rel (%p233) target = $region36
        $region35: #{tpu_custom_call.1} parent=11 // pred_region
          _
        $region36: #{tpu_custom_call.1} parent=11 // pred_fallthru
          _
      $region12: #{tpu_custom_call.1} parent=5 // pred_fallthru
        _
      %p236 = scmp.lt.s32.totalorder %s17, 2
      // Predicated region
      $region37: #{tpu_custom_call.1} parent=5 // pred_check
        %p237 = pneg %p236
      $region38: #{tpu_custom_call.1} parent=5 // pred_check_branch
        %239 = sbr.rel (%p237) target = $region40
      $region39: #{tpu_custom_call.1} parent=5 // pred_region
        // Predicated region
        $region41: #{tpu_custom_call.1} parent=39 // pred_check
          %p240 = pneg %p58
        $region42: #{tpu_custom_call.1} parent=39 // pred_check_branch
          %242 = sbr.rel (%p240) target = $region44
        $region43: #{tpu_custom_call.1} parent=39 // pred_region
          %p243 = scmp.lt.s32.totalorder %s17, 1
          %s244 = scalar_select %p243, %s17, 1
          %s245 = smul.addr %s244, 8
          %s246 = scalar_lea.vmem %s1, %s245
        $region44: #{tpu_custom_call.1} parent=39 // pred_fallthru
          _
      $region40: #{tpu_custom_call.1} parent=5 // pred_fallthru
        _
      %p247 = scmp.le.s32.totalorder 1, %s17
      %p248 = scmp.lt.s32.totalorder %s17, 3
      %p249 = pnand %p247, %p248
      %p250 = pneg %p249
      // Predicated region
      $region45: #{tpu_custom_call.1} parent=5 // pred_check
        _
      $region46: #{tpu_custom_call.1} parent=5 // pred_check_branch
        %252 = sbr.rel (%p249) target = $region48
      $region47: #{tpu_custom_call.1} parent=5 // pred_region
        %s253 = ssub.s32 %s17, 1
        // Predicated region
        $region49: #{tpu_custom_call.1} parent=47 // pred_check
          %p254 = pneg %p38
        $region50: #{tpu_custom_call.1} parent=47 // pred_check_branch
          %256 = sbr.rel (%p254) target = $region52
        $region51: #{tpu_custom_call.1} parent=47 // pred_region
          %257 = dma.done [#allocation4], 16
        $region52: #{tpu_custom_call.1} parent=47 // pred_fallthru
          _
        %258 = sfence
        %p259 = pneg %p38
        %p260 = pneg %p35
        %p261 = scmp.lt.s32.totalorder %s22, 1
        %s262 = scalar_select %p261, %s22, 1
        %s263 = smul.addr %s262, 8
        %s264 = scalar_lea.vmem %s1, %s263
        %p265 = pneg %p64
        %p266 = pneg %p61
        %p267 = pneg %p85
        %p268 = pneg %p82
        %p269 = pneg %p106
        %p270 = pneg %p103
        %p271 = pneg %p127
        %p272 = pneg %p124
        %p273 = pneg %p148
        %p274 = pneg %p145
        %p275 = pneg %p169
        %p276 = pneg %p166
        %p277 = pneg %p195
        %p278 = pneg %p192
        %s279 = sand.u32 %s182, 1
        %s280 = scalar_lea.sflag [#allocation3], %s279
        %s281 = sand.u32 %s182, 1
        %s282 = smul.addr %s281, 32
        %s283 = scalar_lea.vmem [#allocation5], %s282
        %p284 = scmp.lt.s32.totalorder %s22, 1
        %s285 = scalar_select %p284, %s22, 1
        %s286 = smul.addr %s285, 8
        %s287 = scalar_lea.vmem %s1, %s286
        %s288 = sld [smem:[#allocation2]]
        %s289 = sld [smem:[#allocation2 + $0x1]]
        %v290 = vld [vmem:[%s2] sm:$0xff]
        %v291 = vld [vmem:[%s2 + $0x8] sm:$0xff]
        %v292 = vld [vmem:[%s2 + $0x10] sm:$0xff]
        %v293 = vld [vmem:[%s2 + $0x18] sm:$0xff]
        %v294 = vld [vmem:[%s2 + $0x20] sm:$0xff]
        %v295 = vld [vmem:[%s2 + $0x28] sm:$0xff]
        %v296 = vld [vmem:[%s2 + $0x30] sm:$0xff]
        %v297 = vld [vmem:[%s2 + $0x38] sm:$0xff]
        %v298 = vld [vmem:[%s2 + $0x40] sm:$0xff]
        %v299 = vld [vmem:[%s2 + $0x48] sm:$0xff]
        %v300 = vld [vmem:[%s2 + $0x50] sm:$0xff]
        %v301 = vld [vmem:[%s2 + $0x58] sm:$0xff]
        %v302 = vld [vmem:[%s2 + $0x60] sm:$0xff]
        %v303 = vld [vmem:[%s2 + $0x68] sm:$0xff]
        %v304 = vld [vmem:[%s2 + $0x70] sm:$0xff]
        %v305 = vld [vmem:[%s2 + $0x78] sm:$0xff]
        %v306 = vld [vmem:[%s2 + $0x80] sm:$0xff]
        %v307 = vld [vmem:[%s2 + $0x88] sm:$0xff]
        %v308 = vld [vmem:[%s2 + $0x90] sm:$0xff]
        %v309 = vld [vmem:[%s2 + $0x98] sm:$0xff]
        %v310 = vld [vmem:[%s287] sm:$0x1f]
        %vm311 = vcmask 39936
        %v313 = vsel %vm311, %v290, 0
        %v316 = vsel %vm311, %v291, 0
        %v319 = vsel %vm311, %v292, 0
        %v322 = vsel %vm311, %v293, 0
        %v325 = vsel %vm311, %v294, 0
        %v328 = vsel %vm311, %v295, 0
        %v331 = vsel %vm311, %v296, 0
        %v334 = vsel %vm311, %v297, 0
        %v337 = vsel %vm311, %v298, 0
        %v340 = vsel %vm311, %v299, 0
        %v343 = vsel %vm311, %v300, 0
        %v346 = vsel %vm311, %v301, 0
        %v349 = vsel %vm311, %v302, 0
        %v352 = vsel %vm311, %v303, 0
        %v355 = vsel %vm311, %v304, 0
        %v358 = vsel %vm311, %v305, 0
        %v361 = vsel %vm311, %v306, 0
        %v364 = vsel %vm311, %v307, 0
        %v367 = vsel %vm311, %v308, 0
        %v370 = vsel %vm311, %v309, 0
        %vm372 = vcmask 1044480
        %v374 = vsel %vm372, %v310, 0
        %376 = vmatprep.subr.mxu0 0.0
        %377 = vmatpush1.msra.mxu0 %v374
        %378 = vmatprep.subr.mxu0 0.0
        %379 = vmatpush1.msra.mxu0 0.0
        %380 = vmatprep.subr.mxu0 0.0
        %381 = vmatpush1.msra.mxu0 0.0
        %382 = vmatprep.subr.mxu0 0.0
        %383 = vmatpush1.msra.mxu0 0.0
        %384 = vmatprep.subr.mxu0 0.0
        %385 = vmatpush1.msra.mxu0 0.0
        %386 = vmatprep.subr.mxu0 0.0
        %387 = vmatpush1.msra.mxu0 0.0
        %388 = vmatprep.subr.mxu0 0.0
        %389 = vmatpush1.msra.mxu0 0.0
        %390 = vmatprep.subr.mxu0 0.0
        %391 = vmatpush1.msra.mxu0 0.0
        %392 = vmatprep.subr.mxu0 0.0
        %393 = vmatpush1.msra.mxu0 0.0
        %394 = vmatprep.subr.mxu0 0.0
        %395 = vmatpush1.msra.mxu0 0.0
        %396 = vmatprep.subr.mxu0 0.0
        %397 = vmatpush1.msra.mxu0 0.0
        %398 = vmatprep.subr.mxu0 0.0
        %399 = vmatpush1.msra.mxu0 0.0
        %400 = vmatprep.subr.mxu0 0.0
        %401 = vmatpush1.msra.mxu0 0.0
        %402 = vmatprep.subr.mxu0 0.0
        %403 = vmatpush1.msra.mxu0 0.0
        %404 = vmatprep.subr.mxu0 0.0
        %405 = vmatpush1.msra.mxu0 0.0
        %406 = vmatprep.subr.mxu0 0.0
        %407 = vmatpush1.msra.mxu0 0.0
        %408 = vmatprep.subr.mxu0 0.0
        %409 = vmatpush1.msra.mxu0 0.0
        %410 = vmatprep.subr.mxu0 0.0
        %411 = vmatpush1.msra.mxu0 0.0
        %412 = vmatprep.subr.mxu0 0.0
        %413 = vmatpush1.msra.mxu0 0.0
        %414 = vmatprep.subr.mxu0 0.0
        %415 = vmatpush1.msra.mxu0 0.0
        %416 = vmatprep.subr.mxu0 0.0
        %417 = vmatpush1.msra.mxu0 0.0
        %418 = vmatprep.subr.mxu0 0.0
        %419 = vmatpush1.msra.mxu0 0.0
        %420 = vmatprep.subr.mxu0 0.0
        %421 = vmatpush1.msra.mxu0 0.0
        %422 = vmatprep.subr.mxu0 0.0
        %423 = vmatpush1.msra.mxu0 0.0
        %424 = vmatprep.subr.mxu0 0.0
        %425 = vmatpush1.msra.mxu0 0.0
        %426 = vmatprep.subr.mxu0 0.0
        %427 = vmatpush1.msra.mxu0 0.0
        %428 = vmatprep.subr.mxu0 0.0
        %429 = vmatpush1.msra.mxu0 0.0
        %430 = vmatprep.subr.mxu0 0.0
        %431 = vmatpush1.msra.mxu0 0.0
        %432 = vmatprep.subr.mxu0 0.0
        %433 = vmatpush1.msra.mxu0 0.0
        %434 = vmatprep.subr.mxu0 0.0
        %435 = vmatpush1.msra.mxu0 0.0
        %436 = vmatprep.subr.mxu0 0.0
        %437 = vmatpush1.msra.mxu0 0.0
        %438 = vmatprep.subr.mxu0 0.0
        %439 = vmatpush1.msra.mxu0 0.0
        %440 = vmatprep.mubr.f32.mxu0 0.0
        %441 = vmatmul.mubr.f32.gmra.mrb[0].mxu0 %v313
        %v442 = vpop.f32.mrb[0].mxu0
        %v443 = vadd.f32 0.0, %v442
        %v444 = vpop.f32.mrb[0].mxu0
        %445 = vmatprep.mubr.f32.mxu0 0.0
        %446 = vmatmul.mubr.f32.gmra.mrb[0].mxu0 %v316
        %v447 = vpop.f32.mrb[0].mxu0
        %v448 = vadd.f32 0.0, %v447
        %v449 = vpop.f32.mrb[0].mxu0
        %450 = vmatprep.mubr.f32.mxu0 0.0
        %451 = vmatmul.mubr.f32.gmra.mrb[0].mxu0 %v319
        %v452 = vpop.f32.mrb[0].mxu0
        %v453 = vadd.f32 0.0, %v452
        %v454 = vpop.f32.mrb[0].mxu0
        %455 = vmatprep.mubr.f32.mxu0 0.0
        %456 = vmatmul.mubr.f32.gmra.mrb[0].mxu0 %v322
        %v457 = vpop.f32.mrb[0].mxu0
        %v458 = vadd.f32 0.0, %v457
        %v459 = vpop.f32.mrb[0].mxu0
        %460 = vmatprep.mubr.f32.mxu0 0.0
        %461 = vmatmul.mubr.f32.gmra.mrb[0].mxu0 %v325
        %v462 = vpop.f32.mrb[0].mxu0
        %v463 = vadd.f32 0.0, %v462
        %v464 = vpop.f32.mrb[0].mxu0
        %465 = vmatprep.mubr.f32.mxu0 0.0
        %466 = vmatmul.mubr.f32.gmra.mrb[0].mxu0 %v328
        %v467 = vpop.f32.mrb[0].mxu0
        %v468 = vadd.f32 0.0, %v467
        %v469 = vpop.f32.mrb[0].mxu0
        %470 = vmatprep.mubr.f32.mxu0 0.0
        %471 = vmatmul.mubr.f32.gmra.mrb[0].mxu0 %v331
        %v472 = vpop.f32.mrb[0].mxu0
        %v473 = vadd.f32 0.0, %v472
        %v474 = vpop.f32.mrb[0].mxu0
        %475 = vmatprep.mubr.f32.mxu0 0.0
        %476 = vmatmul.mubr.f32.gmra.mrb[0].mxu0 %v334
        %v477 = vpop.f32.mrb[0].mxu0
        %v478 = vadd.f32 0.0, %v477
        %v479 = vpop.f32.mrb[0].mxu0
        %480 = vmatprep.mubr.f32.mxu0 0.0
        %481 = vmatmul.mubr.f32.gmra.mrb[0].mxu0 %v337
        %v482 = vpop.f32.mrb[0].mxu0
        %v483 = vadd.f32 0.0, %v482
        %v484 = vpop.f32.mrb[0].mxu0
        %485 = vmatprep.mubr.f32.mxu0 0.0
        %486 = vmatmul.mubr.f32.gmra.mrb[0].mxu0 %v340
        %v487 = vpop.f32.mrb[0].mxu0
        %v488 = vadd.f32 0.0, %v487
        %v489 = vpop.f32.mrb[0].mxu0
        %490 = vmatprep.mubr.f32.mxu0 0.0
        %491 = vmatmul.mubr.f32.gmra.mrb[0].mxu0 %v343
        %v492 = vpop.f32.mrb[0].mxu0
        %v493 = vadd.f32 0.0, %v492
        %v494 = vpop.f32.mrb[0].mxu0
        %495 = vmatprep.mubr.f32.mxu0 0.0
        %496 = vmatmul.mubr.f32.gmra.mrb[0].mxu0 %v346
        %v497 = vpop.f32.mrb[0].mxu0
        %v498 = vadd.f32 0.0, %v497
        %v499 = vpop.f32.mrb[0].mxu0
        %500 = vmatprep.mubr.f32.mxu0 0.0
        %501 = vmatmul.mubr.f32.gmra.mrb[0].mxu0 %v349
        %v502 = vpop.f32.mrb[0].mxu0
        %v503 = vadd.f32 0.0, %v502
        %v504 = vpop.f32.mrb[0].mxu0
        %505 = vmatprep.mubr.f32.mxu0 0.0
        %506 = vmatmul.mubr.f32.gmra.mrb[0].mxu0 %v352
        %v507 = vpop.f32.mrb[0].mxu0
        %v508 = vadd.f32 0.0, %v507
        %v509 = vpop.f32.mrb[0].mxu0
        %510 = vmatprep.mubr.f32.mxu0 0.0
        %511 = vmatmul.mubr.f32.gmra.mrb[0].mxu0 %v355
        %v512 = vpop.f32.mrb[0].mxu0
        %v513 = vadd.f32 0.0, %v512
        %v514 = vpop.f32.mrb[0].mxu0
        %515 = vmatprep.mubr.f32.mxu0 0.0
        %516 = vmatmul.mubr.f32.gmra.mrb[0].mxu0 %v358
        %v517 = vpop.f32.mrb[0].mxu0
        %v518 = vadd.f32 0.0, %v517
        %v519 = vpop.f32.mrb[0].mxu0
        %520 = vmatprep.mubr.f32.mxu0 0.0
        %521 = vmatmul.mubr.f32.gmra.mrb[0].mxu0 %v361
        %v522 = vpop.f32.mrb[0].mxu0
        %v523 = vadd.f32 0.0, %v522
        %v524 = vpop.f32.mrb[0].mxu0
        %525 = vmatprep.mubr.f32.mxu0 0.0
        %526 = vmatmul.mubr.f32.gmra.mrb[0].mxu0 %v364
        %v527 = vpop.f32.mrb[0].mxu0
        %v528 = vadd.f32 0.0, %v527
        %v529 = vpop.f32.mrb[0].mxu0
        %530 = vmatprep.mubr.f32.mxu0 0.0
        %531 = vmatmul.mubr.f32.gmra.mrb[0].mxu0 %v367
        %v532 = vpop.f32.mrb[0].mxu0
        %v533 = vadd.f32 0.0, %v532
        %v534 = vpop.f32.mrb[0].mxu0
        %535 = vmatprep.mubr.f32.mxu0 0.0
        %536 = vmatmul.mubr.f32.gmra.mrb[0].mxu0 %v370
        %v537 = vpop.f32.mrb[0].mxu0
        %v538 = vadd.f32 0.0, %v537
        %v539 = vpop.f32.mrb[0].mxu0
        %540 = vdwg.mxu0
        %v541 = vstv %s288
        %v542 = vmul.f32 %v541, %v443
        %v543 = vmul.f32 %v541, %v448
        %v544 = vmul.f32 %v541, %v453
        %v545 = vmul.f32 %v541, %v458
        %vm546 = vcmp.lt.f32.partialorder %v542, 20.0
        %vm547 = vcmp.lt.f32.partialorder %v543, 20.0
        %vm548 = vcmp.lt.f32.partialorder %v544, 20.0
        %vm549 = vcmp.lt.f32.partialorder %v545, 20.0
        %v550 = vmul.f32 %v542, 1.442695
        %v551 = vpow.pop %v550
        %v552 = vmul.f32 %v543, 1.442695
        %v553 = vpow.pop %v552
        %v554 = vmul.f32 %v544, 1.442695
        %v555 = vpow.pop %v554
        %v556 = vmul.f32 %v545, 1.442695
        %v557 = vpow.pop %v556
        %v558 = vadd.f32 %v551, 1.0
        %v559 = vlog2.pop %v558
        %v560 = vmul.f32 %v559, 0.6931472
        %v561 = vmul.f32 -0.5, %v551
        %v562 = vadd.f32 %v561, 1.0
        %v563 = vmul.f32 %v562, %v551
        %v564 = vand.u32 2147483647, %v551
        %vm565 = vcmp.lt.f32.partialorder %v564, 0.0004427343
        %v566 = vsel %vm565, %v563, %v560
        %v567 = vadd.f32 %v553, 1.0
        %v568 = vlog2.pop %v567
        %v569 = vmul.f32 %v568, 0.6931472
        %v570 = vmul.f32 -0.5, %v553
        %v571 = vadd.f32 %v570, 1.0
        %v572 = vmul.f32 %v571, %v553
        %v573 = vand.u32 2147483647, %v553
        %vm574 = vcmp.lt.f32.partialorder %v573, 0.0004427343
        %v575 = vsel %vm574, %v572, %v569
        %v576 = vadd.f32 %v555, 1.0
        %v577 = vlog2.pop %v576
        %v578 = vmul.f32 %v577, 0.6931472
        %v579 = vmul.f32 -0.5, %v555
        %v580 = vadd.f32 %v579, 1.0
        %v581 = vmul.f32 %v580, %v555
        %v582 = vand.u32 2147483647, %v555
        %vm583 = vcmp.lt.f32.partialorder %v582, 0.0004427343
        %v584 = vsel %vm583, %v581, %v578
        %v585 = vadd.f32 %v557, 1.0
        %v586 = vlog2.pop %v585
        %v587 = vmul.f32 %v586, 0.6931472
        %v588 = vmul.f32 -0.5, %v557
        %v589 = vadd.f32 %v588, 1.0
        %v590 = vmul.f32 %v589, %v557
        %v591 = vand.u32 2147483647, %v557
        %vm592 = vcmp.lt.f32.partialorder %v591, 0.0004427343
        %v593 = vsel %vm592, %v590, %v587
        %v594 = vstv %s289
        %v595 = vmul.f32 %v566, %v594
        %v596 = vmul.f32 %v575, %v594
        %v597 = vmul.f32 %v584, %v594
        %v598 = vmul.f32 %v593, %v594
        %v599 = vsel %vm546, %v595, %v443
        %v600 = vsel %vm547, %v596, %v448
        %v601 = vsel %vm548, %v597, %v453
        %v602 = vsel %vm549, %v598, %v458
        %v603 = vld [vmem:[%s3] sm:$0xff]
        %v604 = vld [vmem:[%s3 + $0x8] sm:$0xff]
        %v605 = vld [vmem:[%s3 + $0x10] sm:$0xff]
        %v606 = vld [vmem:[%s3 + $0x18] sm:$0xff]
        %v607 = vld [vmem:[%s3 + $0x20] sm:$0xff]
        %v608 = vld [vmem:[%s3 + $0x28] sm:$0xff]
        %v609 = vld [vmem:[%s3 + $0x30] sm:$0xff]
        %v610 = vld [vmem:[%s3 + $0x38] sm:$0xff]
        %v611 = vld [vmem:[%s3 + $0x40] sm:$0xff]
        %v612 = vld [vmem:[%s3 + $0x48] sm:$0xff]
        %v613 = vld [vmem:[%s3 + $0x50] sm:$0xff]
        %v614 = vld [vmem:[%s3 + $0x58] sm:$0xff]
        %vm615 = vcmask 261120
        %v617 = vsel %vm615, %v603, 0
        %v620 = vsel %vm615, %v604, 0
        %v623 = vsel %vm615, %v605, 0
        %v626 = vsel %vm615, %v606, 0
        %v629 = vsel %vm615, %v607, 0
        %v632 = vsel %vm615, %v608, 0
        %v635 = vsel %vm615, %v609, 0
        %v638 = vsel %vm615, %v610, 0
        %v641 = vsel %vm615, %v611, 0
        %v644 = vsel %vm615, %v612, 0
        %v647 = vsel %vm615, %v613, 0
        %v650 = vsel %vm615, %v614, 0
        %652 = vmatprep.subr.mxu0 0.0
        %653 = vmatpush1.msra.mxu0 %v599
        %654 = vmatprep.subr.mxu0 0.0
        %655 = vmatpush1.msra.mxu0 %v600
        %656 = vmatprep.subr.mxu0 0.0
        %657 = vmatpush1.msra.mxu0 %v601
        %658 = vmatprep.subr.mxu0 0.0
        %659 = vmatpush1.msra.mxu0 %v602
        %660 = vmatprep.subr.mxu0 0.0
        %661 = vmatpush1.msra.mxu0 0.0
        %662 = vmatprep.subr.mxu0 0.0
        %663 = vmatpush1.msra.mxu0 0.0
        %664 = vmatprep.subr.mxu0 0.0
        %665 = vmatpush1.msra.mxu0 0.0
        %666 = vmatprep.subr.mxu0 0.0
        %667 = vmatpush1.msra.mxu0 0.0
        %668 = vmatprep.subr.mxu0 0.0
        %669 = vmatpush1.msra.mxu0 0.0
        %670 = vmatprep.subr.mxu0 0.0
        %671 = vmatpush1.msra.mxu0 0.0
        %672 = vmatprep.subr.mxu0 0.0
        %673 = vmatpush1.msra.mxu0 0.0
        %674 = vmatprep.subr.mxu0 0.0
        %675 = vmatpush1.msra.mxu0 0.0
        %676 = vmatprep.subr.mxu0 0.0
        %677 = vmatpush1.msra.mxu0 0.0
        %678 = vmatprep.subr.mxu0 0.0
        %679 = vmatpush1.msra.mxu0 0.0
        %680 = vmatprep.subr.mxu0 0.0
        %681 = vmatpush1.msra.mxu0 0.0
        %682 = vmatprep.subr.mxu0 0.0
        %683 = vmatpush1.msra.mxu0 0.0
        %684 = vmatprep.subr.mxu0 0.0
        %685 = vmatpush1.msra.mxu0 0.0
        %686 = vmatprep.subr.mxu0 0.0
        %687 = vmatpush1.msra.mxu0 0.0
        %688 = vmatprep.subr.mxu0 0.0
        %689 = vmatpush1.msra.mxu0 0.0
        %690 = vmatprep.subr.mxu0 0.0
        %691 = vmatpush1.msra.mxu0 0.0
        %692 = vmatprep.subr.mxu0 0.0
        %693 = vmatpush1.msra.mxu0 0.0
        %694 = vmatprep.subr.mxu0 0.0
        %695 = vmatpush1.msra.mxu0 0.0
        %696 = vmatprep.subr.mxu0 0.0
        %697 = vmatpush1.msra.mxu0 0.0
        %698 = vmatprep.subr.mxu0 0.0
        %699 = vmatpush1.msra.mxu0 0.0
        %700 = vmatprep.subr.mxu0 0.0
        %701 = vmatpush1.msra.mxu0 0.0
        %702 = vmatprep.subr.mxu0 0.0
        %703 = vmatpush1.msra.mxu0 0.0
        %704 = vmatprep.subr.mxu0 0.0
        %705 = vmatpush1.msra.mxu0 0.0
        %706 = vmatprep.subr.mxu0 0.0
        %707 = vmatpush1.msra.mxu0 0.0
        %708 = vmatprep.subr.mxu0 0.0
        %709 = vmatpush1.msra.mxu0 0.0
        %710 = vmatprep.subr.mxu0 0.0
        %711 = vmatpush1.msra.mxu0 0.0
        %712 = vmatprep.subr.mxu0 0.0
        %713 = vmatpush1.msra.mxu0 0.0
        %714 = vmatprep.subr.mxu0 0.0
        %715 = vmatpush1.msra.mxu0 0.0
        %716 = vmatprep.mubr.f32.mxu0 0.0
        %717 = vmatmul.mubr.f32.gmra.mrb[0].mxu0 %v617
        %v718 = vpop.f32.mrb[0].mxu0
        %v719 = vadd.f32 0.0, %v718
        %v720 = vpop.f32.mrb[0].mxu0
        %721 = vmatprep.mubr.f32.mxu0 0.0
        %722 = vmatmul.mubr.f32.gmra.mrb[0].mxu0 %v620
        %v723 = vpop.f32.mrb[0].mxu0
        %v724 = vadd.f32 0.0, %v723
        %v725 = vpop.f32.mrb[0].mxu0
        %726 = vmatprep.mubr.f32.mxu0 0.0
        %727 = vmatmul.mubr.f32.gmra.mrb[0].mxu0 %v623
        %v728 = vpop.f32.mrb[0].mxu0
        %v729 = vadd.f32 0.0, %v728
        %v730 = vpop.f32.mrb[0].mxu0
        %731 = vmatprep.mubr.f32.mxu0 0.0
        %732 = vmatmul.mubr.f32.gmra.mrb[0].mxu0 %v626
        %v733 = vpop.f32.mrb[0].mxu0
        %v734 = vadd.f32 0.0, %v733
        %v735 = vpop.f32.mrb[0].mxu0
        %736 = vmatprep.mubr.f32.mxu0 0.0
        %737 = vmatmul.mubr.f32.gmra.mrb[0].mxu0 %v629
        %v738 = vpop.f32.mrb[0].mxu0
        %v739 = vadd.f32 0.0, %v738
        %v740 = vpop.f32.mrb[0].mxu0
        %741 = vmatprep.mubr.f32.mxu0 0.0
        %742 = vmatmul.mubr.f32.gmra.mrb[0].mxu0 %v632
        %v743 = vpop.f32.mrb[0].mxu0
        %v744 = vadd.f32 0.0, %v743
        %v745 = vpop.f32.mrb[0].mxu0
        %746 = vmatprep.mubr.f32.mxu0 0.0
        %747 = vmatmul.mubr.f32.gmra.mrb[0].mxu0 %v635
        %v748 = vpop.f32.mrb[0].mxu0
        %v749 = vadd.f32 0.0, %v748
        %v750 = vpop.f32.mrb[0].mxu0
        %751 = vmatprep.mubr.f32.mxu0 0.0
        %752 = vmatmul.mubr.f32.gmra.mrb[0].mxu0 %v638
        %v753 = vpop.f32.mrb[0].mxu0
        %v754 = vadd.f32 0.0, %v753
        %v755 = vpop.f32.mrb[0].mxu0
        %756 = vmatprep.mubr.f32.mxu0 0.0
        %757 = vmatmul.mubr.f32.gmra.mrb[0].mxu0 %v641
        %v758 = vpop.f32.mrb[0].mxu0
        %v759 = vadd.f32 0.0, %v758
        %v760 = vpop.f32.mrb[0].mxu0
        %761 = vmatprep.mubr.f32.mxu0 0.0
        %762 = vmatmul.mubr.f32.gmra.mrb[0].mxu0 %v644
        %v763 = vpop.f32.mrb[0].mxu0
        %v764 = vadd.f32 0.0, %v763
        %v765 = vpop.f32.mrb[0].mxu0
        %766 = vmatprep.mubr.f32.mxu0 0.0
        %767 = vmatmul.mubr.f32.gmra.mrb[0].mxu0 %v647
        %v768 = vpop.f32.mrb[0].mxu0
        %v769 = vadd.f32 0.0, %v768
        %v770 = vpop.f32.mrb[0].mxu0
        %771 = vmatprep.mubr.f32.mxu0 0.0
        %772 = vmatmul.mubr.f32.gmra.mrb[0].mxu0 %v650
        %v773 = vpop.f32.mrb[0].mxu0
        %v774 = vadd.f32 0.0, %v773
        %v775 = vpop.f32.mrb[0].mxu0
        %776 = vdwg.mxu0
        %v777 = vadd.f32 %v463, %v719
        %v778 = vadd.f32 %v468, %v724
        %v779 = vadd.f32 %v473, %v729
        %v780 = vadd.f32 %v478, %v734
        %v781 = vadd.f32 %v483, %v739
        %v782 = vadd.f32 %v488, %v744
        %v783 = vadd.f32 %v493, %v749
        %v784 = vadd.f32 %v498, %v754
        %v785 = vadd.f32 %v503, %v759
        %v786 = vadd.f32 %v508, %v764
        %v787 = vadd.f32 %v513, %v769
        %v788 = vadd.f32 %v518, %v774
        %v789 = vmul.f32 %v541, %v777
        %v790 = vmul.f32 %v541, %v778
        %v791 = vmul.f32 %v541, %v779
        %v792 = vmul.f32 %v541, %v780
        %v793 = vmul.f32 %v541, %v781
        %v794 = vmul.f32 %v541, %v782
        %v795 = vmul.f32 %v541, %v783
        %v796 = vmul.f32 %v541, %v784
        %v797 = vmul.f32 %v541, %v785
        %v798 = vmul.f32 %v541, %v786
        %v799 = vmul.f32 %v541, %v787
        %v800 = vmul.f32 %v541, %v788
        %vm801 = vcmp.lt.f32.partialorder %v789, 20.0
        %vm802 = vcmp.lt.f32.partialorder %v790, 20.0
        %vm803 = vcmp.lt.f32.partialorder %v791, 20.0
        %vm804 = vcmp.lt.f32.partialorder %v792, 20.0
        %vm805 = vcmp.lt.f32.partialorder %v793, 20.0
        %vm806 = vcmp.lt.f32.partialorder %v794, 20.0
        %vm807 = vcmp.lt.f32.partialorder %v795, 20.0
        %vm808 = vcmp.lt.f32.partialorder %v796, 20.0
        %vm809 = vcmp.lt.f32.partialorder %v797, 20.0
        %vm810 = vcmp.lt.f32.partialorder %v798, 20.0
        %vm811 = vcmp.lt.f32.partialorder %v799, 20.0
        %vm812 = vcmp.lt.f32.partialorder %v800, 20.0
        %v813 = vmul.f32 %v789, 1.442695
        %v814 = vpow.pop %v813
        %v815 = vmul.f32 %v790, 1.442695
        %v816 = vpow.pop %v815
        %v817 = vmul.f32 %v791, 1.442695
        %v818 = vpow.pop %v817
        %v819 = vmul.f32 %v792, 1.442695
        %v820 = vpow.pop %v819
        %v821 = vmul.f32 %v793, 1.442695
        %v822 = vpow.pop %v821
        %v823 = vmul.f32 %v794, 1.442695
        %v824 = vpow.pop %v823
        %v825 = vmul.f32 %v795, 1.442695
        %v826 = vpow.pop %v825
        %v827 = vmul.f32 %v796, 1.442695
        %v828 = vpow.pop %v827
        %v829 = vmul.f32 %v797, 1.442695
        %v830 = vpow.pop %v829
        %v831 = vmul.f32 %v798, 1.442695
        %v832 = vpow.pop %v831
        %v833 = vmul.f32 %v799, 1.442695
        %v834 = vpow.pop %v833
        %v835 = vmul.f32 %v800, 1.442695
        %v836 = vpow.pop %v835
        %v837 = vadd.f32 %v814, 1.0
        %v838 = vlog2.pop %v837
        %v839 = vmul.f32 %v838, 0.6931472
        %v840 = vmul.f32 -0.5, %v814
        %v841 = vadd.f32 %v840, 1.0
        %v842 = vmul.f32 %v841, %v814
        %v843 = vand.u32 2147483647, %v814
        %vm844 = vcmp.lt.f32.partialorder %v843, 0.0004427343
        %v845 = vsel %vm844, %v842, %v839
        %v846 = vadd.f32 %v816, 1.0
        %v847 = vlog2.pop %v846
        %v848 = vmul.f32 %v847, 0.6931472
        %v849 = vmul.f32 -0.5, %v816
        %v850 = vadd.f32 %v849, 1.0
        %v851 = vmul.f32 %v850, %v816
        %v852 = vand.u32 2147483647, %v816
        %vm853 = vcmp.lt.f32.partialorder %v852, 0.0004427343
        %v854 = vsel %vm853, %v851, %v848
        %v855 = vadd.f32 %v818, 1.0
        %v856 = vlog2.pop %v855
        %v857 = vmul.f32 %v856, 0.6931472
        %v858 = vmul.f32 -0.5, %v818
        %v859 = vadd.f32 %v858, 1.0
        %v860 = vmul.f32 %v859, %v818
        %v861 = vand.u32 2147483647, %v818
        %vm862 = vcmp.lt.f32.partialorder %v861, 0.0004427343
        %v863 = vsel %vm862, %v860, %v857
        %v864 = vadd.f32 %v820, 1.0
        %v865 = vlog2.pop %v864
        %v866 = vmul.f32 %v865, 0.6931472
        %v867 = vmul.f32 -0.5, %v820
        %v868 = vadd.f32 %v867, 1.0
        %v869 = vmul.f32 %v868, %v820
        %v870 = vand.u32 2147483647, %v820
        %vm871 = vcmp.lt.f32.partialorder %v870, 0.0004427343
        %v872 = vsel %vm871, %v869, %v866
        %v873 = vadd.f32 %v822, 1.0
        %v874 = vlog2.pop %v873
        %v875 = vmul.f32 %v874, 0.6931472
        %v876 = vmul.f32 -0.5, %v822
        %v877 = vadd.f32 %v876, 1.0
        %v878 = vmul.f32 %v877, %v822
        %v879 = vand.u32 2147483647, %v822
        %vm880 = vcmp.lt.f32.partialorder %v879, 0.0004427343
        %v881 = vsel %vm880, %v878, %v875
        %v882 = vadd.f32 %v824, 1.0
        %v883 = vlog2.pop %v882
        %v884 = vmul.f32 %v883, 0.6931472
        %v885 = vmul.f32 -0.5, %v824
        %v886 = vadd.f32 %v885, 1.0
        %v887 = vmul.f32 %v886, %v824
        %v888 = vand.u32 2147483647, %v824
        %vm889 = vcmp.lt.f32.partialorder %v888, 0.0004427343
        %v890 = vsel %vm889, %v887, %v884
        %v891 = vadd.f32 %v826, 1.0
        %v892 = vlog2.pop %v891
        %v893 = vmul.f32 %v892, 0.6931472
        %v894 = vmul.f32 -0.5, %v826
        %v895 = vadd.f32 %v894, 1.0
        %v896 = vmul.f32 %v895, %v826
        %v897 = vand.u32 2147483647, %v826
        %vm898 = vcmp.lt.f32.partialorder %v897, 0.0004427343
        %v899 = vsel %vm898, %v896, %v893
        %v900 = vadd.f32 %v828, 1.0
        %v901 = vlog2.pop %v900
        %v902 = vmul.f32 %v901, 0.6931472
        %v903 = vmul.f32 -0.5, %v828
        %v904 = vadd.f32 %v903, 1.0
        %v905 = vmul.f32 %v904, %v828
        %v906 = vand.u32 2147483647, %v828
        %vm907 = vcmp.lt.f32.partialorder %v906, 0.0004427343
        %v908 = vsel %vm907, %v905, %v902
        %v909 = vadd.f32 %v830, 1.0
        %v910 = vlog2.pop %v909
        %v911 = vmul.f32 %v910, 0.6931472
        %v912 = vmul.f32 -0.5, %v830
        %v913 = vadd.f32 %v912, 1.0
        %v914 = vmul.f32 %v913, %v830
        %v915 = vand.u32 2147483647, %v830
        %vm916 = vcmp.lt.f32.partialorder %v915, 0.0004427343
        %v917 = vsel %vm916, %v914, %v911
        %v918 = vadd.f32 %v832, 1.0
        %v919 = vlog2.pop %v918
        %v920 = vmul.f32 %v919, 0.6931472
        %v921 = vmul.f32 -0.5, %v832
        %v922 = vadd.f32 %v921, 1.0
        %v923 = vmul.f32 %v922, %v832
        %v924 = vand.u32 2147483647, %v832
        %vm925 = vcmp.lt.f32.partialorder %v924, 0.0004427343
        %v926 = vsel %vm925, %v923, %v920
        %v927 = vadd.f32 %v834, 1.0
        %v928 = vlog2.pop %v927
        %v929 = vmul.f32 %v928, 0.6931472
        %v930 = vmul.f32 -0.5, %v834
        %v931 = vadd.f32 %v930, 1.0
        %v932 = vmul.f32 %v931, %v834
        %v933 = vand.u32 2147483647, %v834
        %vm934 = vcmp.lt.f32.partialorder %v933, 0.0004427343
        %v935 = vsel %vm934, %v932, %v929
        %v936 = vadd.f32 %v836, 1.0
        %v937 = vlog2.pop %v936
        %v938 = vmul.f32 %v937, 0.6931472
        %v939 = vmul.f32 -0.5, %v836
        %v940 = vadd.f32 %v939, 1.0
        %v941 = vmul.f32 %v940, %v836
        %v942 = vand.u32 2147483647, %v836
        %vm943 = vcmp.lt.f32.partialorder %v942, 0.0004427343
        %v944 = vsel %vm943, %v941, %v938
        %v945 = vmul.f32 %v845, %v594
        %v946 = vmul.f32 %v854, %v594
        %v947 = vmul.f32 %v863, %v594
        %v948 = vmul.f32 %v872, %v594
        %v949 = vmul.f32 %v881, %v594
        %v950 = vmul.f32 %v890, %v594
        %v951 = vmul.f32 %v899, %v594
        %v952 = vmul.f32 %v908, %v594
        %v953 = vmul.f32 %v917, %v594
        %v954 = vmul.f32 %v926, %v594
        %v955 = vmul.f32 %v935, %v594
        %v956 = vmul.f32 %v944, %v594
        %v957 = vsel %vm801, %v945, %v777
        %v958 = vsel %vm802, %v946, %v778
        %v959 = vsel %vm803, %v947, %v779
        %v960 = vsel %vm804, %v948, %v780
        %v961 = vsel %vm805, %v949, %v781
        %v962 = vsel %vm806, %v950, %v782
        %v963 = vsel %vm807, %v951, %v783
        %v964 = vsel %vm808, %v952, %v784
        %v965 = vsel %vm809, %v953, %v785
        %v966 = vsel %vm810, %v954, %v786
        %v967 = vsel %vm811, %v955, %v787
        %v968 = vsel %vm812, %v956, %v788
        %v969 = vld [vmem:[%s4] sm:$0xff]
        %v970 = vld [vmem:[%s4 + $0x8] sm:$0xff]
        %v971 = vld [vmem:[%s4 + $0x10] sm:$0xff]
        %v972 = vld [vmem:[%s4 + $0x18] sm:$0xff]
        %v973 = vmul.f32 %v599, %v965
        %v974 = vmul.f32 %v600, %v966
        %v975 = vmul.f32 %v601, %v967
        %v976 = vmul.f32 %v602, %v968
        %v978 = vsel %vm615, %v969, 0
        %v981 = vsel %vm615, %v970, 0
        %v984 = vsel %vm615, %v971, 0
        %v987 = vsel %vm615, %v972, 0
        %989 = vmatprep.subr.mxu0 0.0
        %990 = vmatpush1.msra.mxu0 %v973
        %991 = vmatprep.subr.mxu0 0.0
        %992 = vmatpush1.msra.mxu0 %v974
        %993 = vmatprep.subr.mxu0 0.0
        %994 = vmatpush1.msra.mxu0 %v975
        %995 = vmatprep.subr.mxu0 0.0
        %996 = vmatpush1.msra.mxu0 %v976
        %997 = vmatprep.subr.mxu0 0.0
        %998 = vmatpush1.msra.mxu0 0.0
        %999 = vmatprep.subr.mxu0 0.0
        %1000 = vmatpush1.msra.mxu0 0.0
        %1001 = vmatprep.subr.mxu0 0.0
        %1002 = vmatpush1.msra.mxu0 0.0
        %1003 = vmatprep.subr.mxu0 0.0
        %1004 = vmatpush1.msra.mxu0 0.0
        %1005 = vmatprep.subr.mxu0 0.0
        %1006 = vmatpush1.msra.mxu0 0.0
        %1007 = vmatprep.subr.mxu0 0.0
        %1008 = vmatpush1.msra.mxu0 0.0
        %1009 = vmatprep.subr.mxu0 0.0
        %1010 = vmatpush1.msra.mxu0 0.0
        %1011 = vmatprep.subr.mxu0 0.0
        %1012 = vmatpush1.msra.mxu0 0.0
        %1013 = vmatprep.subr.mxu0 0.0
        %1014 = vmatpush1.msra.mxu0 0.0
        %1015 = vmatprep.subr.mxu0 0.0
        %1016 = vmatpush1.msra.mxu0 0.0
        %1017 = vmatprep.subr.mxu0 0.0
        %1018 = vmatpush1.msra.mxu0 0.0
        %1019 = vmatprep.subr.mxu0 0.0
        %1020 = vmatpush1.msra.mxu0 0.0
        %1021 = vmatprep.subr.mxu0 0.0
        %1022 = vmatpush1.msra.mxu0 0.0
        %1023 = vmatprep.subr.mxu0 0.0
        %1024 = vmatpush1.msra.mxu0 0.0
        %1025 = vmatprep.subr.mxu0 0.0
        %1026 = vmatpush1.msra.mxu0 0.0
        %1027 = vmatprep.subr.mxu0 0.0
        %1028 = vmatpush1.msra.mxu0 0.0
        %1029 = vmatprep.subr.mxu0 0.0
        %1030 = vmatpush1.msra.mxu0 0.0
        %1031 = vmatprep.subr.mxu0 0.0
        %1032 = vmatpush1.msra.mxu0 0.0
        %1033 = vmatprep.subr.mxu0 0.0
        %1034 = vmatpush1.msra.mxu0 0.0
        %1035 = vmatprep.subr.mxu0 0.0
        %1036 = vmatpush1.msra.mxu0 0.0
        %1037 = vmatprep.subr.mxu0 0.0
        %1038 = vmatpush1.msra.mxu0 0.0
        %1039 = vmatprep.subr.mxu0 0.0
        %1040 = vmatpush1.msra.mxu0 0.0
        %1041 = vmatprep.subr.mxu0 0.0
        %1042 = vmatpush1.msra.mxu0 0.0
        %1043 = vmatprep.subr.mxu0 0.0
        %1044 = vmatpush1.msra.mxu0 0.0
        %1045 = vmatprep.subr.mxu0 0.0
        %1046 = vmatpush1.msra.mxu0 0.0
        %1047 = vmatprep.subr.mxu0 0.0
        %1048 = vmatpush1.msra.mxu0 0.0
        %1049 = vmatprep.subr.mxu0 0.0
        %1050 = vmatpush1.msra.mxu0 0.0
        %1051 = vmatprep.subr.mxu0 0.0
        %1052 = vmatpush1.msra.mxu0 0.0
        %1053 = vmatprep.mubr.f32.mxu0 0.0
        %1054 = vmatmul.mubr.f32.gmra.mrb[0].mxu0 %v978
        %v1055 = vpop.f32.mrb[0].mxu0
        %v1056 = vadd.f32 0.0, %v1055
        %v1057 = vpop.f32.mrb[0].mxu0
        %1058 = vmatprep.mubr.f32.mxu0 0.0
        %1059 = vmatmul.mubr.f32.gmra.mrb[0].mxu0 %v981
        %v1060 = vpop.f32.mrb[0].mxu0
        %v1061 = vadd.f32 0.0, %v1060
        %v1062 = vpop.f32.mrb[0].mxu0
        %1063 = vmatprep.mubr.f32.mxu0 0.0
        %1064 = vmatmul.mubr.f32.gmra.mrb[0].mxu0 %v984
        %v1065 = vpop.f32.mrb[0].mxu0
        %v1066 = vadd.f32 0.0, %v1065
        %v1067 = vpop.f32.mrb[0].mxu0
        %1068 = vmatprep.mubr.f32.mxu0 0.0
        %1069 = vmatmul.mubr.f32.gmra.mrb[0].mxu0 %v987
        %v1070 = vpop.f32.mrb[0].mxu0
        %v1071 = vadd.f32 0.0, %v1070
        %v1072 = vpop.f32.mrb[0].mxu0
        %1073 = vdwg.mxu0
        %v1074 = vadd.f32 %v523, %v1056
        %v1075 = vadd.f32 %v528, %v1061
        %v1076 = vadd.f32 %v533, %v1066
        %v1077 = vadd.f32 %v538, %v1071
        %v1078 = vmul.f32 %v541, %v1074
        %v1079 = vmul.f32 %v541, %v1075
        %v1080 = vmul.f32 %v541, %v1076
        %v1081 = vmul.f32 %v541, %v1077
        %vm1082 = vcmp.lt.f32.partialorder %v1078, 20.0
        %vm1083 = vcmp.lt.f32.partialorder %v1079, 20.0
        %vm1084 = vcmp.lt.f32.partialorder %v1080, 20.0
        %vm1085 = vcmp.lt.f32.partialorder %v1081, 20.0
        %v1086 = vmul.f32 %v1078, 1.442695
        %v1087 = vpow.pop %v1086
        %v1088 = vmul.f32 %v1079, 1.442695
        %v1089 = vpow.pop %v1088
        %v1090 = vmul.f32 %v1080, 1.442695
        %v1091 = vpow.pop %v1090
        %v1092 = vmul.f32 %v1081, 1.442695
        %v1093 = vpow.pop %v1092
        %v1094 = vadd.f32 %v1087, 1.0
        %v1095 = vlog2.pop %v1094
        %v1096 = vmul.f32 %v1095, 0.6931472
        %v1097 = vmul.f32 -0.5, %v1087
        %v1098 = vadd.f32 %v1097, 1.0
        %v1099 = vmul.f32 %v1098, %v1087
        %v1100 = vand.u32 2147483647, %v1087
        %vm1101 = vcmp.lt.f32.partialorder %v1100, 0.0004427343
        %v1102 = vsel %vm1101, %v1099, %v1096
        %v1103 = vadd.f32 %v1089, 1.0
        %v1104 = vlog2.pop %v1103
        %v1105 = vmul.f32 %v1104, 0.6931472
        %v1106 = vmul.f32 -0.5, %v1089
        %v1107 = vadd.f32 %v1106, 1.0
        %v1108 = vmul.f32 %v1107, %v1089
        %v1109 = vand.u32 2147483647, %v1089
        %vm1110 = vcmp.lt.f32.partialorder %v1109, 0.0004427343
        %v1111 = vsel %vm1110, %v1108, %v1105
        %v1112 = vadd.f32 %v1091, 1.0
        %v1113 = vlog2.pop %v1112
        %v1114 = vmul.f32 %v1113, 0.6931472
        %v1115 = vmul.f32 -0.5, %v1091
        %v1116 = vadd.f32 %v1115, 1.0
        %v1117 = vmul.f32 %v1116, %v1091
        %v1118 = vand.u32 2147483647, %v1091
        %vm1119 = vcmp.lt.f32.partialorder %v1118, 0.0004427343
        %v1120 = vsel %vm1119, %v1117, %v1114
        %v1121 = vadd.f32 %v1093, 1.0
        %v1122 = vlog2.pop %v1121
        %v1123 = vmul.f32 %v1122, 0.6931472
        %v1124 = vmul.f32 -0.5, %v1093
        %v1125 = vadd.f32 %v1124, 1.0
        %v1126 = vmul.f32 %v1125, %v1093
        %v1127 = vand.u32 2147483647, %v1093
        %vm1128 = vcmp.lt.f32.partialorder %v1127, 0.0004427343
        %v1129 = vsel %vm1128, %v1126, %v1123
        %v1130 = vmul.f32 %v1102, %v594
        %v1131 = vmul.f32 %v1111, %v594
        %v1132 = vmul.f32 %v1120, %v594
        %v1133 = vmul.f32 %v1129, %v594
        %v1134 = vsel %vm1082, %v1130, %v1074
        %v1135 = vsel %vm1083, %v1131, %v1075
        %v1136 = vsel %vm1084, %v1132, %v1076
        %v1137 = vsel %vm1085, %v1133, %v1077
        %v1138 = vsub.f32 1.0, %v961
        %v1139 = vsub.f32 1.0, %v962
        %v1140 = vsub.f32 1.0, %v963
        %v1141 = vsub.f32 1.0, %v964
        %v1142 = vmul.f32 %v1138, %v1134
        %v1143 = vmul.f32 %v1139, %v1135
        %v1144 = vmul.f32 %v1140, %v1136
        %v1145 = vmul.f32 %v1141, %v1137
        %v1146 = vmul.f32 %v957, %v599
        %v1147 = vmul.f32 %v958, %v600
        %v1148 = vmul.f32 %v959, %v601
        %v1149 = vmul.f32 %v960, %v602
        %v1150 = vadd.f32 %v1142, %v1146
        %v1151 = vadd.f32 %v1143, %v1147
        %v1152 = vadd.f32 %v1144, %v1148
        %v1153 = vadd.f32 %v1145, %v1149
        %1154 = vmatprep.subr.mxu0 0.0
        %1155 = vmatpush1.msra.mxu0 %v1150
        %1156 = vmatprep.subr.mxu0 0.0
        %1157 = vmatpush1.msra.mxu0 %v1151
        %1158 = vmatprep.subr.mxu0 0.0
        %1159 = vmatpush1.msra.mxu0 %v1152
        %1160 = vmatprep.subr.mxu0 0.0
        %1161 = vmatpush1.msra.mxu0 %v1153
        %1162 = vmatprep.subr.mxu0 0.0
        %1163 = vmatpush1.msra.mxu0 0.0
        %1164 = vmatprep.subr.mxu0 0.0
        %1165 = vmatpush1.msra.mxu0 0.0
        %1166 = vmatprep.subr.mxu0 0.0
        %1167 = vmatpush1.msra.mxu0 0.0
        %1168 = vmatprep.subr.mxu0 0.0
        %1169 = vmatpush1.msra.mxu0 0.0
        %1170 = vmatprep.subr.mxu0 0.0
        %1171 = vmatpush1.msra.mxu0 0.0
        %1172 = vmatprep.subr.mxu0 0.0
        %1173 = vmatpush1.msra.mxu0 0.0
        %1174 = vmatprep.subr.mxu0 0.0
        %1175 = vmatpush1.msra.mxu0 0.0
        %1176 = vmatprep.subr.mxu0 0.0
        %1177 = vmatpush1.msra.mxu0 0.0
        %1178 = vmatprep.subr.mxu0 0.0
        %1179 = vmatpush1.msra.mxu0 0.0
        %1180 = vmatprep.subr.mxu0 0.0
        %1181 = vmatpush1.msra.mxu0 0.0
        %1182 = vmatprep.subr.mxu0 0.0
        %1183 = vmatpush1.msra.mxu0 0.0
        %1184 = vmatprep.subr.mxu0 0.0
        %1185 = vmatpush1.msra.mxu0 0.0
        %1186 = vmatprep.subr.mxu0 0.0
        %1187 = vmatpush1.msra.mxu0 0.0
        %1188 = vmatprep.subr.mxu0 0.0
        %1189 = vmatpush1.msra.mxu0 0.0
        %1190 = vmatprep.subr.mxu0 0.0
        %1191 = vmatpush1.msra.mxu0 0.0
        %1192 = vmatprep.subr.mxu0 0.0
        %1193 = vmatpush1.msra.mxu0 0.0
        %1194 = vmatprep.subr.mxu0 0.0
        %1195 = vmatpush1.msra.mxu0 0.0
        %1196 = vmatprep.subr.mxu0 0.0
        %1197 = vmatpush1.msra.mxu0 0.0
        %1198 = vmatprep.subr.mxu0 0.0
        %1199 = vmatpush1.msra.mxu0 0.0
        %1200 = vmatprep.subr.mxu0 0.0
        %1201 = vmatpush1.msra.mxu0 0.0
        %1202 = vmatprep.subr.mxu0 0.0
        %1203 = vmatpush1.msra.mxu0 0.0
        %1204 = vmatprep.subr.mxu0 0.0
        %1205 = vmatpush1.msra.mxu0 0.0
        %1206 = vmatprep.subr.mxu0 0.0
        %1207 = vmatpush1.msra.mxu0 0.0
        %1208 = vmatprep.subr.mxu0 0.0
        %1209 = vmatpush1.msra.mxu0 0.0
        %1210 = vmatprep.subr.mxu0 0.0
        %1211 = vmatpush1.msra.mxu0 0.0
        %1212 = vmatprep.subr.mxu0 0.0
        %1213 = vmatpush1.msra.mxu0 0.0
        %1214 = vmatprep.subr.mxu0 0.0
        %1215 = vmatpush1.msra.mxu0 0.0
        %1216 = vmatprep.subr.mxu0 0.0
        %1217 = vmatpush1.msra.mxu0 0.0
        %1218 = vmatprep.mubr.f32.mxu0 0.0
        %1219 = vmatmul.mubr.f32.gmra.mrb[0].mxu0 %v617
        %v1220 = vpop.f32.mrb[0].mxu0
        %v1221 = vadd.f32 0.0, %v1220
        %v1222 = vpop.f32.mrb[0].mxu0
        %1223 = vmatprep.mubr.f32.mxu0 0.0
        %1224 = vmatmul.mubr.f32.gmra.mrb[0].mxu0 %v620
        %v1225 = vpop.f32.mrb[0].mxu0
        %v1226 = vadd.f32 0.0, %v1225
        %v1227 = vpop.f32.mrb[0].mxu0
        %1228 = vmatprep.mubr.f32.mxu0 0.0
        %1229 = vmatmul.mubr.f32.gmra.mrb[0].mxu0 %v623
        %v1230 = vpop.f32.mrb[0].mxu0
        %v1231 = vadd.f32 0.0, %v1230
        %v1232 = vpop.f32.mrb[0].mxu0
        %1233 = vmatprep.mubr.f32.mxu0 0.0
        %1234 = vmatmul.mubr.f32.gmra.mrb[0].mxu0 %v626
        %v1235 = vpop.f32.mrb[0].mxu0
        %v1236 = vadd.f32 0.0, %v1235
        %v1237 = vpop.f32.mrb[0].mxu0
        %1238 = vmatprep.mubr.f32.mxu0 0.0
        %1239 = vmatmul.mubr.f32.gmra.mrb[0].mxu0 %v629
        %v1240 = vpop.f32.mrb[0].mxu0
        %v1241 = vadd.f32 0.0, %v1240
        %v1242 = vpop.f32.mrb[0].mxu0
        %1243 = vmatprep.mubr.f32.mxu0 0.0
        %1244 = vmatmul.mubr.f32.gmra.mrb[0].mxu0 %v632
        %v1245 = vpop.f32.mrb[0].mxu0
        %v1246 = vadd.f32 0.0, %v1245
        %v1247 = vpop.f32.mrb[0].mxu0
        %1248 = vmatprep.mubr.f32.mxu0 0.0
        %1249 = vmatmul.mubr.f32.gmra.mrb[0].mxu0 %v635
        %v1250 = vpop.f32.mrb[0].mxu0
        %v1251 = vadd.f32 0.0, %v1250
        %v1252 = vpop.f32.mrb[0].mxu0
        %1253 = vmatprep.mubr.f32.mxu0 0.0
        %1254 = vmatmul.mubr.f32.gmra.mrb[0].mxu0 %v638
        %v1255 = vpop.f32.mrb[0].mxu0
        %v1256 = vadd.f32 0.0, %v1255
        %v1257 = vpop.f32.mrb[0].mxu0
        %1258 = vmatprep.mubr.f32.mxu0 0.0
        %1259 = vmatmul.mubr.f32.gmra.mrb[0].mxu0 %v641
        %v1260 = vpop.f32.mrb[0].mxu0
        %v1261 = vadd.f32 0.0, %v1260
        %v1262 = vpop.f32.mrb[0].mxu0
        %1263 = vmatprep.mubr.f32.mxu0 0.0
        %1264 = vmatmul.mubr.f32.gmra.mrb[0].mxu0 %v644
        %v1265 = vpop.f32.mrb[0].mxu0
        %v1266 = vadd.f32 0.0, %v1265
        %v1267 = vpop.f32.mrb[0].mxu0
        %1268 = vmatprep.mubr.f32.mxu0 0.0
        %1269 = vmatmul.mubr.f32.gmra.mrb[0].mxu0 %v647
        %v1270 = vpop.f32.mrb[0].mxu0
        %v1271 = vadd.f32 0.0, %v1270
        %v1272 = vpop.f32.mrb[0].mxu0
        %1273 = vmatprep.mubr.f32.mxu0 0.0
        %1274 = vmatmul.mubr.f32.gmra.mrb[0].mxu0 %v650
        %v1275 = vpop.f32.mrb[0].mxu0
        %v1276 = vadd.f32 0.0, %v1275
        %v1277 = vpop.f32.mrb[0].mxu0
        %1278 = vdwg.mxu0
        %v1279 = vadd.f32 %v463, %v1221
        %v1280 = vadd.f32 %v468, %v1226
        %v1281 = vadd.f32 %v473, %v1231
        %v1282 = vadd.f32 %v478, %v1236
        %v1283 = vadd.f32 %v483, %v1241
        %v1284 = vadd.f32 %v488, %v1246
        %v1285 = vadd.f32 %v493, %v1251
        %v1286 = vadd.f32 %v498, %v1256
        %v1287 = vadd.f32 %v503, %v1261
        %v1288 = vadd.f32 %v508, %v1266
        %v1289 = vadd.f32 %v513, %v1271
        %v1290 = vadd.f32 %v518, %v1276
        %v1291 = vmul.f32 %v541, %v1279
        %v1292 = vmul.f32 %v541, %v1280
        %v1293 = vmul.f32 %v541, %v1281
        %v1294 = vmul.f32 %v541, %v1282
        %v1295 = vmul.f32 %v541, %v1283
        %v1296 = vmul.f32 %v541, %v1284
        %v1297 = vmul.f32 %v541, %v1285
        %v1298 = vmul.f32 %v541, %v1286
        %v1299 = vmul.f32 %v541, %v1287
        %v1300 = vmul.f32 %v541, %v1288
        %v1301 = vmul.f32 %v541, %v1289
        %v1302 = vmul.f32 %v541, %v1290
        %vm1303 = vcmp.lt.f32.partialorder %v1291, 20.0
        %vm1304 = vcmp.lt.f32.partialorder %v1292, 20.0
        %vm1305 = vcmp.lt.f32.partialorder %v1293, 20.0
        %vm1306 = vcmp.lt.f32.partialorder %v1294, 20.0
        %vm1307 = vcmp.lt.f32.partialorder %v1295, 20.0
        %vm1308 = vcmp.lt.f32.partialorder %v1296, 20.0
        %vm1309 = vcmp.lt.f32.partialorder %v1297, 20.0
        %vm1310 = vcmp.lt.f32.partialorder %v1298, 20.0
        %vm1311 = vcmp.lt.f32.partialorder %v1299, 20.0
        %vm1312 = vcmp.lt.f32.partialorder %v1300, 20.0
        %vm1313 = vcmp.lt.f32.partialorder %v1301, 20.0
        %vm1314 = vcmp.lt.f32.partialorder %v1302, 20.0
        %v1315 = vmul.f32 %v1291, 1.442695
        %v1316 = vpow.pop %v1315
        %v1317 = vmul.f32 %v1292, 1.442695
        %v1318 = vpow.pop %v1317
        %v1319 = vmul.f32 %v1293, 1.442695
        %v1320 = vpow.pop %v1319
        %v1321 = vmul.f32 %v1294, 1.442695
        %v1322 = vpow.pop %v1321
        %v1323 = vmul.f32 %v1295, 1.442695
        %v1324 = vpow.pop %v1323
        %v1325 = vmul.f32 %v1296, 1.442695
        %v1326 = vpow.pop %v1325
        %v1327 = vmul.f32 %v1297, 1.442695
        %v1328 = vpow.pop %v1327
        %v1329 = vmul.f32 %v1298, 1.442695
        %v1330 = vpow.pop %v1329
        %v1331 = vmul.f32 %v1299, 1.442695
        %v1332 = vpow.pop %v1331
        %v1333 = vmul.f32 %v1300, 1.442695
        %v1334 = vpow.pop %v1333
        %v1335 = vmul.f32 %v1301, 1.442695
        %v1336 = vpow.pop %v1335
        %v1337 = vmul.f32 %v1302, 1.442695
        %v1338 = vpow.pop %v1337
        %v1339 = vadd.f32 %v1316, 1.0
        %v1340 = vlog2.pop %v1339
        %v1341 = vmul.f32 %v1340, 0.6931472
        %v1342 = vmul.f32 -0.5, %v1316
        %v1343 = vadd.f32 %v1342, 1.0
        %v1344 = vmul.f32 %v1343, %v1316
        %v1345 = vand.u32 2147483647, %v1316
        %vm1346 = vcmp.lt.f32.partialorder %v1345, 0.0004427343
        %v1347 = vsel %vm1346, %v1344, %v1341
        %v1348 = vadd.f32 %v1318, 1.0
        %v1349 = vlog2.pop %v1348
        %v1350 = vmul.f32 %v1349, 0.6931472
        %v1351 = vmul.f32 -0.5, %v1318
        %v1352 = vadd.f32 %v1351, 1.0
        %v1353 = vmul.f32 %v1352, %v1318
        %v1354 = vand.u32 2147483647, %v1318
        %vm1355 = vcmp.lt.f32.partialorder %v1354, 0.0004427343
        %v1356 = vsel %vm1355, %v1353, %v1350
        %v1357 = vadd.f32 %v1320, 1.0
        %v1358 = vlog2.pop %v1357
        %v1359 = vmul.f32 %v1358, 0.6931472
        %v1360 = vmul.f32 -0.5, %v1320
        %v1361 = vadd.f32 %v1360, 1.0
        %v1362 = vmul.f32 %v1361, %v1320
        %v1363 = vand.u32 2147483647, %v1320
        %vm1364 = vcmp.lt.f32.partialorder %v1363, 0.0004427343
        %v1365 = vsel %vm1364, %v1362, %v1359
        %v1366 = vadd.f32 %v1322, 1.0
        %v1367 = vlog2.pop %v1366
        %v1368 = vmul.f32 %v1367, 0.6931472
        %v1369 = vmul.f32 -0.5, %v1322
        %v1370 = vadd.f32 %v1369, 1.0
        %v1371 = vmul.f32 %v1370, %v1322
        %v1372 = vand.u32 2147483647, %v1322
        %vm1373 = vcmp.lt.f32.partialorder %v1372, 0.0004427343
        %v1374 = vsel %vm1373, %v1371, %v1368
        %v1375 = vadd.f32 %v1324, 1.0
        %v1376 = vlog2.pop %v1375
        %v1377 = vmul.f32 %v1376, 0.6931472
        %v1378 = vmul.f32 -0.5, %v1324
        %v1379 = vadd.f32 %v1378, 1.0
        %v1380 = vmul.f32 %v1379, %v1324
        %v1381 = vand.u32 2147483647, %v1324
        %vm1382 = vcmp.lt.f32.partialorder %v1381, 0.0004427343
        %v1383 = vsel %vm1382, %v1380, %v1377
        %v1384 = vadd.f32 %v1326, 1.0
        %v1385 = vlog2.pop %v1384
        %v1386 = vmul.f32 %v1385, 0.6931472
        %v1387 = vmul.f32 -0.5, %v1326
        %v1388 = vadd.f32 %v1387, 1.0
        %v1389 = vmul.f32 %v1388, %v1326
        %v1390 = vand.u32 2147483647, %v1326
        %vm1391 = vcmp.lt.f32.partialorder %v1390, 0.0004427343
        %v1392 = vsel %vm1391, %v1389, %v1386
        %v1393 = vadd.f32 %v1328, 1.0
        %v1394 = vlog2.pop %v1393
        %v1395 = vmul.f32 %v1394, 0.6931472
        %v1396 = vmul.f32 -0.5, %v1328
        %v1397 = vadd.f32 %v1396, 1.0
        %v1398 = vmul.f32 %v1397, %v1328
        %v1399 = vand.u32 2147483647, %v1328
        %vm1400 = vcmp.lt.f32.partialorder %v1399, 0.0004427343
        %v1401 = vsel %vm1400, %v1398, %v1395
        %v1402 = vadd.f32 %v1330, 1.0
        %v1403 = vlog2.pop %v1402
        %v1404 = vmul.f32 %v1403, 0.6931472
        %v1405 = vmul.f32 -0.5, %v1330
        %v1406 = vadd.f32 %v1405, 1.0
        %v1407 = vmul.f32 %v1406, %v1330
        %v1408 = vand.u32 2147483647, %v1330
        %vm1409 = vcmp.lt.f32.partialorder %v1408, 0.0004427343
        %v1410 = vsel %vm1409, %v1407, %v1404
        %v1411 = vadd.f32 %v1332, 1.0
        %v1412 = vlog2.pop %v1411
        %v1413 = vmul.f32 %v1412, 0.6931472
        %v1414 = vmul.f32 -0.5, %v1332
        %v1415 = vadd.f32 %v1414, 1.0
        %v1416 = vmul.f32 %v1415, %v1332
        %v1417 = vand.u32 2147483647, %v1332
        %vm1418 = vcmp.lt.f32.partialorder %v1417, 0.0004427343
        %v1419 = vsel %vm1418, %v1416, %v1413
        %v1420 = vadd.f32 %v1334, 1.0
        %v1421 = vlog2.pop %v1420
        %v1422 = vmul.f32 %v1421, 0.6931472
        %v1423 = vmul.f32 -0.5, %v1334
        %v1424 = vadd.f32 %v1423, 1.0
        %v1425 = vmul.f32 %v1424, %v1334
        %v1426 = vand.u32 2147483647, %v1334
        %vm1427 = vcmp.lt.f32.partialorder %v1426, 0.0004427343
        %v1428 = vsel %vm1427, %v1425, %v1422
        %v1429 = vadd.f32 %v1336, 1.0
        %v1430 = vlog2.pop %v1429
        %v1431 = vmul.f32 %v1430, 0.6931472
        %v1432 = vmul.f32 -0.5, %v1336
        %v1433 = vadd.f32 %v1432, 1.0
        %v1434 = vmul.f32 %v1433, %v1336
        %v1435 = vand.u32 2147483647, %v1336
        %vm1436 = vcmp.lt.f32.partialorder %v1435, 0.0004427343
        %v1437 = vsel %vm1436, %v1434, %v1431
        %v1438 = vadd.f32 %v1338, 1.0
        %v1439 = vlog2.pop %v1438
        %v1440 = vmul.f32 %v1439, 0.6931472
        %v1441 = vmul.f32 -0.5, %v1338
        %v1442 = vadd.f32 %v1441, 1.0
        %v1443 = vmul.f32 %v1442, %v1338
        %v1444 = vand.u32 2147483647, %v1338
        %vm1445 = vcmp.lt.f32.partialorder %v1444, 0.0004427343
        %v1446 = vsel %vm1445, %v1443, %v1440
        %v1447 = vmul.f32 %v1347, %v594
        %v1448 = vmul.f32 %v1356, %v594
        %v1449 = vmul.f32 %v1365, %v594
        %v1450 = vmul.f32 %v1374, %v594
        %v1451 = vmul.f32 %v1383, %v594
        %v1452 = vmul.f32 %v1392, %v594
        %v1453 = vmul.f32 %v1401, %v594
        %v1454 = vmul.f32 %v1410, %v594
        %v1455 = vmul.f32 %v1419, %v594
        %v1456 = vmul.f32 %v1428, %v594
        %v1457 = vmul.f32 %v1437, %v594
        %v1458 = vmul.f32 %v1446, %v594
        %v1459 = vsel %vm1303, %v1447, %v1279
        %v1460 = vsel %vm1304, %v1448, %v1280
        %v1461 = vsel %vm1305, %v1449, %v1281
        %v1462 = vsel %vm1306, %v1450, %v1282
        %v1463 = vsel %vm1307, %v1451, %v1283
        %v1464 = vsel %vm1308, %v1452, %v1284
        %v1465 = vsel %vm1309, %v1453, %v1285
        %v1466 = vsel %vm1310, %v1454, %v1286
        %v1467 = vsel %vm1311, %v1455, %v1287
        %v1468 = vsel %vm1312, %v1456, %v1288
        %v1469 = vsel %vm1313, %v1457, %v1289
        %v1470 = vsel %vm1314, %v1458, %v1290
        %v1471 = vmul.f32 %v1150, %v1467
        %v1472 = vmul.f32 %v1151, %v1468
        %v1473 = vmul.f32 %v1152, %v1469
        %v1474 = vmul.f32 %v1153, %v1470
        %1475 = vmatprep.subr.mxu0 0.0
        %1476 = vmatpush1.msra.mxu0 %v1471
        %1477 = vmatprep.subr.mxu0 0.0
        %1478 = vmatpush1.msra.mxu0 %v1472
        %1479 = vmatprep.subr.mxu0 0.0
        %1480 = vmatpush1.msra.mxu0 %v1473
        %1481 = vmatprep.subr.mxu0 0.0
        %1482 = vmatpush1.msra.mxu0 %v1474
        %1483 = vmatprep.subr.mxu0 0.0
        %1484 = vmatpush1.msra.mxu0 0.0
        %1485 = vmatprep.subr.mxu0 0.0
        %1486 = vmatpush1.msra.mxu0 0.0
        %1487 = vmatprep.subr.mxu0 0.0
        %1488 = vmatpush1.msra.mxu0 0.0
        %1489 = vmatprep.subr.mxu0 0.0
        %1490 = vmatpush1.msra.mxu0 0.0
        %1491 = vmatprep.subr.mxu0 0.0
        %1492 = vmatpush1.msra.mxu0 0.0
        %1493 = vmatprep.subr.mxu0 0.0
        %1494 = vmatpush1.msra.mxu0 0.0
        %1495 = vmatprep.subr.mxu0 0.0
        %1496 = vmatpush1.msra.mxu0 0.0
        %1497 = vmatprep.subr.mxu0 0.0
        %1498 = vmatpush1.msra.mxu0 0.0
        %1499 = vmatprep.subr.mxu0 0.0
        %1500 = vmatpush1.msra.mxu0 0.0
        %1501 = vmatprep.subr.mxu0 0.0
        %1502 = vmatpush1.msra.mxu0 0.0
        %1503 = vmatprep.subr.mxu0 0.0
        %1504 = vmatpush1.msra.mxu0 0.0
        %1505 = vmatprep.subr.mxu0 0.0
        %1506 = vmatpush1.msra.mxu0 0.0
        %1507 = vmatprep.subr.mxu0 0.0
        %1508 = vmatpush1.msra.mxu0 0.0
        %1509 = vmatprep.subr.mxu0 0.0
        %1510 = vmatpush1.msra.mxu0 0.0
        %1511 = vmatprep.subr.mxu0 0.0
        %1512 = vmatpush1.msra.mxu0 0.0
        %1513 = vmatprep.subr.mxu0 0.0
        %1514 = vmatpush1.msra.mxu0 0.0
        %1515 = vmatprep.subr.mxu0 0.0
        %1516 = vmatpush1.msra.mxu0 0.0
        %1517 = vmatprep.subr.mxu0 0.0
        %1518 = vmatpush1.msra.mxu0 0.0
        %1519 = vmatprep.subr.mxu0 0.0
        %1520 = vmatpush1.msra.mxu0 0.0
        %1521 = vmatprep.subr.mxu0 0.0
        %1522 = vmatpush1.msra.mxu0 0.0
        %1523 = vmatprep.subr.mxu0 0.0
        %1524 = vmatpush1.msra.mxu0 0.0
        %1525 = vmatprep.subr.mxu0 0.0
        %1526 = vmatpush1.msra.mxu0 0.0
        %1527 = vmatprep.subr.mxu0 0.0
        %1528 = vmatpush1.msra.mxu0 0.0
        %1529 = vmatprep.subr.mxu0 0.0
        %1530 = vmatpush1.msra.mxu0 0.0
        %1531 = vmatprep.subr.mxu0 0.0
        %1532 = vmatpush1.msra.mxu0 0.0
        %1533 = vmatprep.subr.mxu0 0.0
        %1534 = vmatpush1.msra.mxu0 0.0
        %1535 = vmatprep.subr.mxu0 0.0
        %1536 = vmatpush1.msra.mxu0 0.0
        %1537 = vmatprep.subr.mxu0 0.0
        %1538 = vmatpush1.msra.mxu0 0.0
        %1539 = vmatprep.mubr.f32.mxu0 0.0
        %1540 = vmatmul.mubr.f32.gmra.mrb[0].mxu0 %v978
        %v1541 = vpop.f32.mrb[0].mxu0
        %v1542 = vadd.f32 0.0, %v1541
        %v1543 = vpop.f32.mrb[0].mxu0
        %1544 = vmatprep.mubr.f32.mxu0 0.0
        %1545 = vmatmul.mubr.f32.gmra.mrb[0].mxu0 %v981
        %v1546 = vpop.f32.mrb[0].mxu0
        %v1547 = vadd.f32 0.0, %v1546
        %v1548 = vpop.f32.mrb[0].mxu0
        %1549 = vmatprep.mubr.f32.mxu0 0.0
        %1550 = vmatmul.mubr.f32.gmra.mrb[0].mxu0 %v984
        %v1551 = vpop.f32.mrb[0].mxu0
        %v1552 = vadd.f32 0.0, %v1551
        %v1553 = vpop.f32.mrb[0].mxu0
        %1554 = vmatprep.mubr.f32.mxu0 0.0
        %1555 = vmatmul.mubr.f32.gmra.mrb[0].mxu0 %v987
        %v1556 = vpop.f32.mrb[0].mxu0
        %v1557 = vadd.f32 0.0, %v1556
        %v1558 = vpop.f32.mrb[0].mxu0
        %1559 = vdwg.mxu0
        %v1560 = vadd.f32 %v523, %v1542
        %v1561 = vadd.f32 %v528, %v1547
        %v1562 = vadd.f32 %v533, %v1552
        %v1563 = vadd.f32 %v538, %v1557
        %v1564 = vmul.f32 %v541, %v1560
        %v1565 = vmul.f32 %v541, %v1561
        %v1566 = vmul.f32 %v541, %v1562
        %v1567 = vmul.f32 %v541, %v1563
        %vm1568 = vcmp.lt.f32.partialorder %v1564, 20.0
        %vm1569 = vcmp.lt.f32.partialorder %v1565, 20.0
        %vm1570 = vcmp.lt.f32.partialorder %v1566, 20.0
        %vm1571 = vcmp.lt.f32.partialorder %v1567, 20.0
        %v1572 = vmul.f32 %v1564, 1.442695
        %v1573 = vpow.pop %v1572
        %v1574 = vmul.f32 %v1565, 1.442695
        %v1575 = vpow.pop %v1574
        %v1576 = vmul.f32 %v1566, 1.442695
        %v1577 = vpow.pop %v1576
        %v1578 = vmul.f32 %v1567, 1.442695
        %v1579 = vpow.pop %v1578
        %v1580 = vadd.f32 %v1573, 1.0
        %v1581 = vlog2.pop %v1580
        %v1582 = vmul.f32 %v1581, 0.6931472
        %v1583 = vmul.f32 -0.5, %v1573
        %v1584 = vadd.f32 %v1583, 1.0
        %v1585 = vmul.f32 %v1584, %v1573
        %v1586 = vand.u32 2147483647, %v1573
        %vm1587 = vcmp.lt.f32.partialorder %v1586, 0.0004427343
        %v1588 = vsel %vm1587, %v1585, %v1582
        %v1589 = vadd.f32 %v1575, 1.0
        %v1590 = vlog2.pop %v1589
        %v1591 = vmul.f32 %v1590, 0.6931472
        %v1592 = vmul.f32 -0.5, %v1575
        %v1593 = vadd.f32 %v1592, 1.0
        %v1594 = vmul.f32 %v1593, %v1575
        %v1595 = vand.u32 2147483647, %v1575
        %vm1596 = vcmp.lt.f32.partialorder %v1595, 0.0004427343
        %v1597 = vsel %vm1596, %v1594, %v1591
        %v1598 = vadd.f32 %v1577, 1.0
        %v1599 = vlog2.pop %v1598
        %v1600 = vmul.f32 %v1599, 0.6931472
        %v1601 = vmul.f32 -0.5, %v1577
        %v1602 = vadd.f32 %v1601, 1.0
        %v1603 = vmul.f32 %v1602, %v1577
        %v1604 = vand.u32 2147483647, %v1577
        %vm1605 = vcmp.lt.f32.partialorder %v1604, 0.0004427343
        %v1606 = vsel %vm1605, %v1603, %v1600
        %v1607 = vadd.f32 %v1579, 1.0
        %v1608 = vlog2.pop %v1607
        %v1609 = vmul.f32 %v1608, 0.6931472
        %v1610 = vmul.f32 -0.5, %v1579
        %v1611 = vadd.f32 %v1610, 1.0
        %v1612 = vmul.f32 %v1611, %v1579
        %v1613 = vand.u32 2147483647, %v1579
        %vm1614 = vcmp.lt.f32.partialorder %v1613, 0.0004427343
        %v1615 = vsel %vm1614, %v1612, %v1609
        %v1616 = vmul.f32 %v1588, %v594
        %v1617 = vmul.f32 %v1597, %v594
        %v1618 = vmul.f32 %v1606, %v594
        %v1619 = vmul.f32 %v1615, %v594
        %v1620 = vsel %vm1568, %v1616, %v1560
        %v1621 = vsel %vm1569, %v1617, %v1561
        %v1622 = vsel %vm1570, %v1618, %v1562
        %v1623 = vsel %vm1571, %v1619, %v1563
        %v1624 = vsub.f32 1.0, %v1463
        %v1625 = vsub.f32 1.0, %v1464
        %v1626 = vsub.f32 1.0, %v1465
        %v1627 = vsub.f32 1.0, %v1466
        %v1628 = vmul.f32 %v1624, %v1620
        %v1629 = vmul.f32 %v1625, %v1621
        %v1630 = vmul.f32 %v1626, %v1622
        %v1631 = vmul.f32 %v1627, %v1623
        %v1632 = vmul.f32 %v1459, %v1150
        %v1633 = vmul.f32 %v1460, %v1151
        %v1634 = vmul.f32 %v1461, %v1152
        %v1635 = vmul.f32 %v1462, %v1153
        %v1636 = vadd.f32 %v1628, %v1632
        %v1637 = vadd.f32 %v1629, %v1633
        %v1638 = vadd.f32 %v1630, %v1634
        %v1639 = vadd.f32 %v1631, %v1635
        %1640 = vmatprep.subr.mxu0 0.0
        %1641 = vmatpush1.msra.mxu0 %v1636
        %1642 = vmatprep.subr.mxu0 0.0
        %1643 = vmatpush1.msra.mxu0 %v1637
        %1644 = vmatprep.subr.mxu0 0.0
        %1645 = vmatpush1.msra.mxu0 %v1638
        %1646 = vmatprep.subr.mxu0 0.0
        %1647 = vmatpush1.msra.mxu0 %v1639
        %1648 = vmatprep.subr.mxu0 0.0
        %1649 = vmatpush1.msra.mxu0 0.0
        %1650 = vmatprep.subr.mxu0 0.0
        %1651 = vmatpush1.msra.mxu0 0.0
        %1652 = vmatprep.subr.mxu0 0.0
        %1653 = vmatpush1.msra.mxu0 0.0
        %1654 = vmatprep.subr.mxu0 0.0
        %1655 = vmatpush1.msra.mxu0 0.0
        %1656 = vmatprep.subr.mxu0 0.0
        %1657 = vmatpush1.msra.mxu0 0.0
        %1658 = vmatprep.subr.mxu0 0.0
        %1659 = vmatpush1.msra.mxu0 0.0
        %1660 = vmatprep.subr.mxu0 0.0
        %1661 = vmatpush1.msra.mxu0 0.0
        %1662 = vmatprep.subr.mxu0 0.0
        %1663 = vmatpush1.msra.mxu0 0.0
        %1664 = vmatprep.subr.mxu0 0.0
        %1665 = vmatpush1.msra.mxu0 0.0
        %1666 = vmatprep.subr.mxu0 0.0
        %1667 = vmatpush1.msra.mxu0 0.0
        %1668 = vmatprep.subr.mxu0 0.0
        %1669 = vmatpush1.msra.mxu0 0.0
        %1670 = vmatprep.subr.mxu0 0.0
        %1671 = vmatpush1.msra.mxu0 0.0
        %1672 = vmatprep.subr.mxu0 0.0
        %1673 = vmatpush1.msra.mxu0 0.0
        %1674 = vmatprep.subr.mxu0 0.0
        %1675 = vmatpush1.msra.mxu0 0.0
        %1676 = vmatprep.subr.mxu0 0.0
        %1677 = vmatpush1.msra.mxu0 0.0
        %1678 = vmatprep.subr.mxu0 0.0
        %1679 = vmatpush1.msra.mxu0 0.0
        %1680 = vmatprep.subr.mxu0 0.0
        %1681 = vmatpush1.msra.mxu0 0.0
        %1682 = vmatprep.subr.mxu0 0.0
        %1683 = vmatpush1.msra.mxu0 0.0
        %1684 = vmatprep.subr.mxu0 0.0
        %1685 = vmatpush1.msra.mxu0 0.0
        %1686 = vmatprep.subr.mxu0 0.0
        %1687 = vmatpush1.msra.mxu0 0.0
        %1688 = vmatprep.subr.mxu0 0.0
        %1689 = vmatpush1.msra.mxu0 0.0
        %1690 = vmatprep.subr.mxu0 0.0
        %1691 = vmatpush1.msra.mxu0 0.0
        %1692 = vmatprep.subr.mxu0 0.0
        %1693 = vmatpush1.msra.mxu0 0.0
        %1694 = vmatprep.subr.mxu0 0.0
        %1695 = vmatpush1.msra.mxu0 0.0
        %1696 = vmatprep.subr.mxu0 0.0
        %1697 = vmatpush1.msra.mxu0 0.0
        %1698 = vmatprep.subr.mxu0 0.0
        %1699 = vmatpush1.msra.mxu0 0.0
        %1700 = vmatprep.subr.mxu0 0.0
        %1701 = vmatpush1.msra.mxu0 0.0
        %1702 = vmatprep.subr.mxu0 0.0
        %1703 = vmatpush1.msra.mxu0 0.0
        %1704 = vmatprep.mubr.f32.mxu0 0.0
        %1705 = vmatmul.mubr.f32.gmra.mrb[0].mxu0 %v617
        %v1706 = vpop.f32.mrb[0].mxu0
        %v1707 = vadd.f32 0.0, %v1706
        %v1708 = vpop.f32.mrb[0].mxu0
        %1709 = vmatprep.mubr.f32.mxu0 0.0
        %1710 = vmatmul.mubr.f32.gmra.mrb[0].mxu0 %v620
        %v1711 = vpop.f32.mrb[0].mxu0
        %v1712 = vadd.f32 0.0, %v1711
        %v1713 = vpop.f32.mrb[0].mxu0
        %1714 = vmatprep.mubr.f32.mxu0 0.0
        %1715 = vmatmul.mubr.f32.gmra.mrb[0].mxu0 %v623
        %v1716 = vpop.f32.mrb[0].mxu0
        %v1717 = vadd.f32 0.0, %v1716
        %v1718 = vpop.f32.mrb[0].mxu0
        %1719 = vmatprep.mubr.f32.mxu0 0.0
        %1720 = vmatmul.mubr.f32.gmra.mrb[0].mxu0 %v626
        %v1721 = vpop.f32.mrb[0].mxu0
        %v1722 = vadd.f32 0.0, %v1721
        %v1723 = vpop.f32.mrb[0].mxu0
        %1724 = vmatprep.mubr.f32.mxu0 0.0
        %1725 = vmatmul.mubr.f32.gmra.mrb[0].mxu0 %v629
        %v1726 = vpop.f32.mrb[0].mxu0
        %v1727 = vadd.f32 0.0, %v1726
        %v1728 = vpop.f32.mrb[0].mxu0
        %1729 = vmatprep.mubr.f32.mxu0 0.0
        %1730 = vmatmul.mubr.f32.gmra.mrb[0].mxu0 %v632
        %v1731 = vpop.f32.mrb[0].mxu0
        %v1732 = vadd.f32 0.0, %v1731
        %v1733 = vpop.f32.mrb[0].mxu0
        %1734 = vmatprep.mubr.f32.mxu0 0.0
        %1735 = vmatmul.mubr.f32.gmra.mrb[0].mxu0 %v635
        %v1736 = vpop.f32.mrb[0].mxu0
        %v1737 = vadd.f32 0.0, %v1736
        %v1738 = vpop.f32.mrb[0].mxu0
        %1739 = vmatprep.mubr.f32.mxu0 0.0
        %1740 = vmatmul.mubr.f32.gmra.mrb[0].mxu0 %v638
        %v1741 = vpop.f32.mrb[0].mxu0
        %v1742 = vadd.f32 0.0, %v1741
        %v1743 = vpop.f32.mrb[0].mxu0
        %1744 = vmatprep.mubr.f32.mxu0 0.0
        %1745 = vmatmul.mubr.f32.gmra.mrb[0].mxu0 %v641
        %v1746 = vpop.f32.mrb[0].mxu0
        %v1747 = vadd.f32 0.0, %v1746
        %v1748 = vpop.f32.mrb[0].mxu0
        %1749 = vmatprep.mubr.f32.mxu0 0.0
        %1750 = vmatmul.mubr.f32.gmra.mrb[0].mxu0 %v644
        %v1751 = vpop.f32.mrb[0].mxu0
        %v1752 = vadd.f32 0.0, %v1751
        %v1753 = vpop.f32.mrb[0].mxu0
        %1754 = vmatprep.mubr.f32.mxu0 0.0
        %1755 = vmatmul.mubr.f32.gmra.mrb[0].mxu0 %v647
        %v1756 = vpop.f32.mrb[0].mxu0
        %v1757 = vadd.f32 0.0, %v1756
        %v1758 = vpop.f32.mrb[0].mxu0
        %1759 = vmatprep.mubr.f32.mxu0 0.0
        %1760 = vmatmul.mubr.f32.gmra.mrb[0].mxu0 %v650
        %v1761 = vpop.f32.mrb[0].mxu0
        %v1762 = vadd.f32 0.0, %v1761
        %v1763 = vpop.f32.mrb[0].mxu0
        %1764 = vdwg.mxu0
        %v1765 = vadd.f32 %v463, %v1707
        %v1766 = vadd.f32 %v468, %v1712
        %v1767 = vadd.f32 %v473, %v1717
        %v1768 = vadd.f32 %v478, %v1722
        %v1769 = vadd.f32 %v483, %v1727
        %v1770 = vadd.f32 %v488, %v1732
        %v1771 = vadd.f32 %v493, %v1737
        %v1772 = vadd.f32 %v498, %v1742
        %v1773 = vadd.f32 %v503, %v1747
        %v1774 = vadd.f32 %v508, %v1752
        %v1775 = vadd.f32 %v513, %v1757
        %v1776 = vadd.f32 %v518, %v1762
        %v1777 = vmul.f32 %v541, %v1765
        %v1778 = vmul.f32 %v541, %v1766
        %v1779 = vmul.f32 %v541, %v1767
        %v1780 = vmul.f32 %v541, %v1768
        %v1781 = vmul.f32 %v541, %v1769
        %v1782 = vmul.f32 %v541, %v1770
        %v1783 = vmul.f32 %v541, %v1771
        %v1784 = vmul.f32 %v541, %v1772
        %v1785 = vmul.f32 %v541, %v1773
        %v1786 = vmul.f32 %v541, %v1774
        %v1787 = vmul.f32 %v541, %v1775
        %v1788 = vmul.f32 %v541, %v1776
        %vm1789 = vcmp.lt.f32.partialorder %v1777, 20.0
        %vm1790 = vcmp.lt.f32.partialorder %v1778, 20.0
        %vm1791 = vcmp.lt.f32.partialorder %v1779, 20.0
        %vm1792 = vcmp.lt.f32.partialorder %v1780, 20.0
        %vm1793 = vcmp.lt.f32.partialorder %v1781, 20.0
        %vm1794 = vcmp.lt.f32.partialorder %v1782, 20.0
        %vm1795 = vcmp.lt.f32.partialorder %v1783, 20.0
        %vm1796 = vcmp.lt.f32.partialorder %v1784, 20.0
        %vm1797 = vcmp.lt.f32.partialorder %v1785, 20.0
        %vm1798 = vcmp.lt.f32.partialorder %v1786, 20.0
        %vm1799 = vcmp.lt.f32.partialorder %v1787, 20.0
        %vm1800 = vcmp.lt.f32.partialorder %v1788, 20.0
        %v1801 = vmul.f32 %v1777, 1.442695
        %v1802 = vpow.pop %v1801
        %v1803 = vmul.f32 %v1778, 1.442695
        %v1804 = vpow.pop %v1803
        %v1805 = vmul.f32 %v1779, 1.442695
        %v1806 = vpow.pop %v1805
        %v1807 = vmul.f32 %v1780, 1.442695
        %v1808 = vpow.pop %v1807
        %v1809 = vmul.f32 %v1781, 1.442695
        %v1810 = vpow.pop %v1809
        %v1811 = vmul.f32 %v1782, 1.442695
        %v1812 = vpow.pop %v1811
        %v1813 = vmul.f32 %v1783, 1.442695
        %v1814 = vpow.pop %v1813
        %v1815 = vmul.f32 %v1784, 1.442695
        %v1816 = vpow.pop %v1815
        %v1817 = vmul.f32 %v1785, 1.442695
        %v1818 = vpow.pop %v1817
        %v1819 = vmul.f32 %v1786, 1.442695
        %v1820 = vpow.pop %v1819
        %v1821 = vmul.f32 %v1787, 1.442695
        %v1822 = vpow.pop %v1821
        %v1823 = vmul.f32 %v1788, 1.442695
        %v1824 = vpow.pop %v1823
        %v1825 = vadd.f32 %v1802, 1.0
        %v1826 = vlog2.pop %v1825
        %v1827 = vmul.f32 %v1826, 0.6931472
        %v1828 = vmul.f32 -0.5, %v1802
        %v1829 = vadd.f32 %v1828, 1.0
        %v1830 = vmul.f32 %v1829, %v1802
        %v1831 = vand.u32 2147483647, %v1802
        %vm1832 = vcmp.lt.f32.partialorder %v1831, 0.0004427343
        %v1833 = vsel %vm1832, %v1830, %v1827
        %v1834 = vadd.f32 %v1804, 1.0
        %v1835 = vlog2.pop %v1834
        %v1836 = vmul.f32 %v1835, 0.6931472
        %v1837 = vmul.f32 -0.5, %v1804
        %v1838 = vadd.f32 %v1837, 1.0
        %v1839 = vmul.f32 %v1838, %v1804
        %v1840 = vand.u32 2147483647, %v1804
        %vm1841 = vcmp.lt.f32.partialorder %v1840, 0.0004427343
        %v1842 = vsel %vm1841, %v1839, %v1836
        %v1843 = vadd.f32 %v1806, 1.0
        %v1844 = vlog2.pop %v1843
        %v1845 = vmul.f32 %v1844, 0.6931472
        %v1846 = vmul.f32 -0.5, %v1806
        %v1847 = vadd.f32 %v1846, 1.0
        %v1848 = vmul.f32 %v1847, %v1806
        %v1849 = vand.u32 2147483647, %v1806
        %vm1850 = vcmp.lt.f32.partialorder %v1849, 0.0004427343
        %v1851 = vsel %vm1850, %v1848, %v1845
        %v1852 = vadd.f32 %v1808, 1.0
        %v1853 = vlog2.pop %v1852
        %v1854 = vmul.f32 %v1853, 0.6931472
        %v1855 = vmul.f32 -0.5, %v1808
        %v1856 = vadd.f32 %v1855, 1.0
        %v1857 = vmul.f32 %v1856, %v1808
        %v1858 = vand.u32 2147483647, %v1808
        %vm1859 = vcmp.lt.f32.partialorder %v1858, 0.0004427343
        %v1860 = vsel %vm1859, %v1857, %v1854
        %v1861 = vadd.f32 %v1810, 1.0
        %v1862 = vlog2.pop %v1861
        %v1863 = vmul.f32 %v1862, 0.6931472
        %v1864 = vmul.f32 -0.5, %v1810
        %v1865 = vadd.f32 %v1864, 1.0
        %v1866 = vmul.f32 %v1865, %v1810
        %v1867 = vand.u32 2147483647, %v1810
        %vm1868 = vcmp.lt.f32.partialorder %v1867, 0.0004427343
        %v1869 = vsel %vm1868, %v1866, %v1863
        %v1870 = vadd.f32 %v1812, 1.0
        %v1871 = vlog2.pop %v1870
        %v1872 = vmul.f32 %v1871, 0.6931472
        %v1873 = vmul.f32 -0.5, %v1812
        %v1874 = vadd.f32 %v1873, 1.0
        %v1875 = vmul.f32 %v1874, %v1812
        %v1876 = vand.u32 2147483647, %v1812
        %vm1877 = vcmp.lt.f32.partialorder %v1876, 0.0004427343
        %v1878 = vsel %vm1877, %v1875, %v1872
        %v1879 = vadd.f32 %v1814, 1.0
        %v1880 = vlog2.pop %v1879
        %v1881 = vmul.f32 %v1880, 0.6931472
        %v1882 = vmul.f32 -0.5, %v1814
        %v1883 = vadd.f32 %v1882, 1.0
        %v1884 = vmul.f32 %v1883, %v1814
        %v1885 = vand.u32 2147483647, %v1814
        %vm1886 = vcmp.lt.f32.partialorder %v1885, 0.0004427343
        %v1887 = vsel %vm1886, %v1884, %v1881
        %v1888 = vadd.f32 %v1816, 1.0
        %v1889 = vlog2.pop %v1888
        %v1890 = vmul.f32 %v1889, 0.6931472
        %v1891 = vmul.f32 -0.5, %v1816
        %v1892 = vadd.f32 %v1891, 1.0
        %v1893 = vmul.f32 %v1892, %v1816
        %v1894 = vand.u32 2147483647, %v1816
        %vm1895 = vcmp.lt.f32.partialorder %v1894, 0.0004427343
        %v1896 = vsel %vm1895, %v1893, %v1890
        %v1897 = vadd.f32 %v1818, 1.0
        %v1898 = vlog2.pop %v1897
        %v1899 = vmul.f32 %v1898, 0.6931472
        %v1900 = vmul.f32 -0.5, %v1818
        %v1901 = vadd.f32 %v1900, 1.0
        %v1902 = vmul.f32 %v1901, %v1818
        %v1903 = vand.u32 2147483647, %v1818
        %vm1904 = vcmp.lt.f32.partialorder %v1903, 0.0004427343
        %v1905 = vsel %vm1904, %v1902, %v1899
        %v1906 = vadd.f32 %v1820, 1.0
        %v1907 = vlog2.pop %v1906
        %v1908 = vmul.f32 %v1907, 0.6931472
        %v1909 = vmul.f32 -0.5, %v1820
        %v1910 = vadd.f32 %v1909, 1.0
        %v1911 = vmul.f32 %v1910, %v1820
        %v1912 = vand.u32 2147483647, %v1820
        %vm1913 = vcmp.lt.f32.partialorder %v1912, 0.0004427343
        %v1914 = vsel %vm1913, %v1911, %v1908
        %v1915 = vadd.f32 %v1822, 1.0
        %v1916 = vlog2.pop %v1915
        %v1917 = vmul.f32 %v1916, 0.6931472
        %v1918 = vmul.f32 -0.5, %v1822
        %v1919 = vadd.f32 %v1918, 1.0
        %v1920 = vmul.f32 %v1919, %v1822
        %v1921 = vand.u32 2147483647, %v1822
        %vm1922 = vcmp.lt.f32.partialorder %v1921, 0.0004427343
        %v1923 = vsel %vm1922, %v1920, %v1917
        %v1924 = vadd.f32 %v1824, 1.0
        %v1925 = vlog2.pop %v1924
        %v1926 = vmul.f32 %v1925, 0.6931472
        %v1927 = vmul.f32 -0.5, %v1824
        %v1928 = vadd.f32 %v1927, 1.0
        %v1929 = vmul.f32 %v1928, %v1824
        %v1930 = vand.u32 2147483647, %v1824
        %vm1931 = vcmp.lt.f32.partialorder %v1930, 0.0004427343
        %v1932 = vsel %vm1931, %v1929, %v1926
        %v1933 = vmul.f32 %v1833, %v594
        %v1934 = vmul.f32 %v1842, %v594
        %v1935 = vmul.f32 %v1851, %v594
        %v1936 = vmul.f32 %v1860, %v594
        %v1937 = vmul.f32 %v1869, %v594
        %v1938 = vmul.f32 %v1878, %v594
        %v1939 = vmul.f32 %v1887, %v594
        %v1940 = vmul.f32 %v1896, %v594
        %v1941 = vmul.f32 %v1905, %v594
        %v1942 = vmul.f32 %v1914, %v594
        %v1943 = vmul.f32 %v1923, %v594
        %v1944 = vmul.f32 %v1932, %v594
        %v1945 = vsel %vm1789, %v1933, %v1765
        %v1946 = vsel %vm1790, %v1934, %v1766
        %v1947 = vsel %vm1791, %v1935, %v1767
        %v1948 = vsel %vm1792, %v1936, %v1768
        %v1949 = vsel %vm1793, %v1937, %v1769
        %v1950 = vsel %vm1794, %v1938, %v1770
        %v1951 = vsel %vm1795, %v1939, %v1771
        %v1952 = vsel %vm1796, %v1940, %v1772
        %v1953 = vsel %vm1797, %v1941, %v1773
        %v1954 = vsel %vm1798, %v1942, %v1774
        %v1955 = vsel %vm1799, %v1943, %v1775
        %v1956 = vsel %vm1800, %v1944, %v1776
        %v1957 = vmul.f32 %v1636, %v1953
        %v1958 = vmul.f32 %v1637, %v1954
        %v1959 = vmul.f32 %v1638, %v1955
        %v1960 = vmul.f32 %v1639, %v1956
        %1961 = vmatprep.subr.mxu0 0.0
        %1962 = vmatpush1.msra.mxu0 %v1957
        %1963 = vmatprep.subr.mxu0 0.0
        %1964 = vmatpush1.msra.mxu0 %v1958
        %1965 = vmatprep.subr.mxu0 0.0
        %1966 = vmatpush1.msra.mxu0 %v1959
        %1967 = vmatprep.subr.mxu0 0.0
        %1968 = vmatpush1.msra.mxu0 %v1960
        %1969 = vmatprep.subr.mxu0 0.0
        %1970 = vmatpush1.msra.mxu0 0.0
        %1971 = vmatprep.subr.mxu0 0.0
        %1972 = vmatpush1.msra.mxu0 0.0
        %1973 = vmatprep.subr.mxu0 0.0
        %1974 = vmatpush1.msra.mxu0 0.0
        %1975 = vmatprep.subr.mxu0 0.0
        %1976 = vmatpush1.msra.mxu0 0.0
        %1977 = vmatprep.subr.mxu0 0.0
        %1978 = vmatpush1.msra.mxu0 0.0
        %1979 = vmatprep.subr.mxu0 0.0
        %1980 = vmatpush1.msra.mxu0 0.0
        %1981 = vmatprep.subr.mxu0 0.0
        %1982 = vmatpush1.msra.mxu0 0.0
        %1983 = vmatprep.subr.mxu0 0.0
        %1984 = vmatpush1.msra.mxu0 0.0
        %1985 = vmatprep.subr.mxu0 0.0
        %1986 = vmatpush1.msra.mxu0 0.0
        %1987 = vmatprep.subr.mxu0 0.0
        %1988 = vmatpush1.msra.mxu0 0.0
        %1989 = vmatprep.subr.mxu0 0.0
        %1990 = vmatpush1.msra.mxu0 0.0
        %1991 = vmatprep.subr.mxu0 0.0
        %1992 = vmatpush1.msra.mxu0 0.0
        %1993 = vmatprep.subr.mxu0 0.0
        %1994 = vmatpush1.msra.mxu0 0.0
        %1995 = vmatprep.subr.mxu0 0.0
        %1996 = vmatpush1.msra.mxu0 0.0
        %1997 = vmatprep.subr.mxu0 0.0
        %1998 = vmatpush1.msra.mxu0 0.0
        %1999 = vmatprep.subr.mxu0 0.0
        %2000 = vmatpush1.msra.mxu0 0.0
        %2001 = vmatprep.subr.mxu0 0.0
        %2002 = vmatpush1.msra.mxu0 0.0
        %2003 = vmatprep.subr.mxu0 0.0
        %2004 = vmatpush1.msra.mxu0 0.0
        %2005 = vmatprep.subr.mxu0 0.0
        %2006 = vmatpush1.msra.mxu0 0.0
        %2007 = vmatprep.subr.mxu0 0.0
        %2008 = vmatpush1.msra.mxu0 0.0
        %2009 = vmatprep.subr.mxu0 0.0
        %2010 = vmatpush1.msra.mxu0 0.0
        %2011 = vmatprep.subr.mxu0 0.0
        %2012 = vmatpush1.msra.mxu0 0.0
        %2013 = vmatprep.subr.mxu0 0.0
        %2014 = vmatpush1.msra.mxu0 0.0
        %2015 = vmatprep.subr.mxu0 0.0
        %2016 = vmatpush1.msra.mxu0 0.0
        %2017 = vmatprep.subr.mxu0 0.0
        %2018 = vmatpush1.msra.mxu0 0.0
        %2019 = vmatprep.subr.mxu0 0.0
        %2020 = vmatpush1.msra.mxu0 0.0
        %2021 = vmatprep.subr.mxu0 0.0
        %2022 = vmatpush1.msra.mxu0 0.0
        %2023 = vmatprep.subr.mxu0 0.0
        %2024 = vmatpush1.msra.mxu0 0.0
        %2025 = vmatprep.mubr.f32.mxu0 0.0
        %2026 = vmatmul.mubr.f32.gmra.mrb[0].mxu0 %v978
        %v2027 = vpop.f32.mrb[0].mxu0
        %v2028 = vadd.f32 0.0, %v2027
        %v2029 = vpop.f32.mrb[0].mxu0
        %2030 = vmatprep.mubr.f32.mxu0 0.0
        %2031 = vmatmul.mubr.f32.gmra.mrb[0].mxu0 %v981
        %v2032 = vpop.f32.mrb[0].mxu0
        %v2033 = vadd.f32 0.0, %v2032
        %v2034 = vpop.f32.mrb[0].mxu0
        %2035 = vmatprep.mubr.f32.mxu0 0.0
        %2036 = vmatmul.mubr.f32.gmra.mrb[0].mxu0 %v984
        %v2037 = vpop.f32.mrb[0].mxu0
        %v2038 = vadd.f32 0.0, %v2037
        %v2039 = vpop.f32.mrb[0].mxu0
        %2040 = vmatprep.mubr.f32.mxu0 0.0
        %2041 = vmatmul.mubr.f32.gmra.mrb[0].mxu0 %v987
        %v2042 = vpop.f32.mrb[0].mxu0
        %v2043 = vadd.f32 0.0, %v2042
        %v2044 = vpop.f32.mrb[0].mxu0
        %2045 = vdwg.mxu0
        %v2046 = vadd.f32 %v523, %v2028
        %v2047 = vadd.f32 %v528, %v2033
        %v2048 = vadd.f32 %v533, %v2038
        %v2049 = vadd.f32 %v538, %v2043
        %v2050 = vmul.f32 %v541, %v2046
        %v2051 = vmul.f32 %v541, %v2047
        %v2052 = vmul.f32 %v541, %v2048
        %v2053 = vmul.f32 %v541, %v2049
        %vm2054 = vcmp.lt.f32.partialorder %v2050, 20.0
        %vm2055 = vcmp.lt.f32.partialorder %v2051, 20.0
        %vm2056 = vcmp.lt.f32.partialorder %v2052, 20.0
        %vm2057 = vcmp.lt.f32.partialorder %v2053, 20.0
        %v2058 = vmul.f32 %v2050, 1.442695
        %v2059 = vpow.pop %v2058
        %v2060 = vmul.f32 %v2051, 1.442695
        %v2061 = vpow.pop %v2060
        %v2062 = vmul.f32 %v2052, 1.442695
        %v2063 = vpow.pop %v2062
        %v2064 = vmul.f32 %v2053, 1.442695
        %v2065 = vpow.pop %v2064
        %v2066 = vadd.f32 %v2059, 1.0
        %v2067 = vlog2.pop %v2066
        %v2068 = vmul.f32 %v2067, 0.6931472
        %v2069 = vmul.f32 -0.5, %v2059
        %v2070 = vadd.f32 %v2069, 1.0
        %v2071 = vmul.f32 %v2070, %v2059
        %v2072 = vand.u32 2147483647, %v2059
        %vm2073 = vcmp.lt.f32.partialorder %v2072, 0.0004427343
        %v2074 = vsel %vm2073, %v2071, %v2068
        %v2075 = vadd.f32 %v2061, 1.0
        %v2076 = vlog2.pop %v2075
        %v2077 = vmul.f32 %v2076, 0.6931472
        %v2078 = vmul.f32 -0.5, %v2061
        %v2079 = vadd.f32 %v2078, 1.0
        %v2080 = vmul.f32 %v2079, %v2061
        %v2081 = vand.u32 2147483647, %v2061
        %vm2082 = vcmp.lt.f32.partialorder %v2081, 0.0004427343
        %v2083 = vsel %vm2082, %v2080, %v2077
        %v2084 = vadd.f32 %v2063, 1.0
        %v2085 = vlog2.pop %v2084
        %v2086 = vmul.f32 %v2085, 0.6931472
        %v2087 = vmul.f32 -0.5, %v2063
        %v2088 = vadd.f32 %v2087, 1.0
        %v2089 = vmul.f32 %v2088, %v2063
        %v2090 = vand.u32 2147483647, %v2063
        %vm2091 = vcmp.lt.f32.partialorder %v2090, 0.0004427343
        %v2092 = vsel %vm2091, %v2089, %v2086
        %v2093 = vadd.f32 %v2065, 1.0
        %v2094 = vlog2.pop %v2093
        %v2095 = vmul.f32 %v2094, 0.6931472
        %v2096 = vmul.f32 -0.5, %v2065
        %v2097 = vadd.f32 %v2096, 1.0
        %v2098 = vmul.f32 %v2097, %v2065
        %v2099 = vand.u32 2147483647, %v2065
        %vm2100 = vcmp.lt.f32.partialorder %v2099, 0.0004427343
        %v2101 = vsel %vm2100, %v2098, %v2095
        %v2102 = vmul.f32 %v2074, %v594
        %v2103 = vmul.f32 %v2083, %v594
        %v2104 = vmul.f32 %v2092, %v594
        %v2105 = vmul.f32 %v2101, %v594
        %v2106 = vsel %vm2054, %v2102, %v2046
        %v2107 = vsel %vm2055, %v2103, %v2047
        %v2108 = vsel %vm2056, %v2104, %v2048
        %v2109 = vsel %vm2057, %v2105, %v2049
        %v2110 = vsub.f32 1.0, %v1949
        %v2111 = vsub.f32 1.0, %v1950
        %v2112 = vsub.f32 1.0, %v1951
        %v2113 = vsub.f32 1.0, %v1952
        %v2114 = vmul.f32 %v2110, %v2106
        %v2115 = vmul.f32 %v2111, %v2107
        %v2116 = vmul.f32 %v2112, %v2108
        %v2117 = vmul.f32 %v2113, %v2109
        %v2118 = vmul.f32 %v1945, %v1636
        %v2119 = vmul.f32 %v1946, %v1637
        %v2120 = vmul.f32 %v1947, %v1638
        %v2121 = vmul.f32 %v1948, %v1639
        %v2122 = vadd.f32 %v2114, %v2118
        %v2123 = vadd.f32 %v2115, %v2119
        %v2124 = vadd.f32 %v2116, %v2120
        %v2125 = vadd.f32 %v2117, %v2121
        %v2126 = vld [vmem:[%s5] sm:$0xff]
        %v2127 = vld [vmem:[%s5 + $0x8] sm:$0xff]
        %v2128 = vld [vmem:[%s5 + $0x10] sm:$0xff]
        %v2129 = vld [vmem:[%s5 + $0x18] sm:$0xff]
        %v2130 = vld [vmem:[%s6] sm:$0xff]
        %v2131 = vld [vmem:[%s6 + $0x8] sm:$0xff]
        %v2132 = vld [vmem:[%s6 + $0x10] sm:$0xff]
        %v2133 = vld [vmem:[%s6 + $0x18] sm:$0xff]
        %2135 = vset.pattern.permute.xlu0 0
        %2136 = vperm.xlu0 %2135, %v2130
        %v2137 = vpop.permute.xlu0 %2136
        %2140 = vset.pattern.permute.xlu0 0
        %2141 = vperm.xlu0 %2140, %v2131
        %v2142 = vpop.permute.xlu0 %2141
        %2145 = vset.pattern.permute.xlu0 0
        %2146 = vperm.xlu0 %2145, %v2132
        %v2147 = vpop.permute.xlu0 %2146
        %2150 = vset.pattern.permute.xlu0 0
        %2151 = vperm.xlu0 %2150, %v2133
        %v2152 = vpop.permute.xlu0 %2151
        %v2155 = vsel %vm615, %v2126, 0
        %v2158 = vsel %vm615, %v2127, 0
        %v2161 = vsel %vm615, %v2128, 0
        %v2164 = vsel %vm615, %v2129, 0
        %2166 = vmatprep.subr.mxu0 0.0
        %2167 = vmatpush1.msra.mxu0 %v2122
        %2168 = vmatprep.subr.mxu0 0.0
        %2169 = vmatpush1.msra.mxu0 %v2123
        %2170 = vmatprep.subr.mxu0 0.0
        %2171 = vmatpush1.msra.mxu0 %v2124
        %2172 = vmatprep.subr.mxu0 0.0
        %2173 = vmatpush1.msra.mxu0 %v2125
        %2174 = vmatprep.subr.mxu0 0.0
        %2175 = vmatpush1.msra.mxu0 0.0
        %2176 = vmatprep.subr.mxu0 0.0
        %2177 = vmatpush1.msra.mxu0 0.0
        %2178 = vmatprep.subr.mxu0 0.0
        %2179 = vmatpush1.msra.mxu0 0.0
        %2180 = vmatprep.subr.mxu0 0.0
        %2181 = vmatpush1.msra.mxu0 0.0
        %2182 = vmatprep.subr.mxu0 0.0
        %2183 = vmatpush1.msra.mxu0 0.0
        %2184 = vmatprep.subr.mxu0 0.0
        %2185 = vmatpush1.msra.mxu0 0.0
        %2186 = vmatprep.subr.mxu0 0.0
        %2187 = vmatpush1.msra.mxu0 0.0
        %2188 = vmatprep.subr.mxu0 0.0
        %2189 = vmatpush1.msra.mxu0 0.0
        %2190 = vmatprep.subr.mxu0 0.0
        %2191 = vmatpush1.msra.mxu0 0.0
        %2192 = vmatprep.subr.mxu0 0.0
        %2193 = vmatpush1.msra.mxu0 0.0
        %2194 = vmatprep.subr.mxu0 0.0
        %2195 = vmatpush1.msra.mxu0 0.0
        %2196 = vmatprep.subr.mxu0 0.0
        %2197 = vmatpush1.msra.mxu0 0.0
        %2198 = vmatprep.subr.mxu0 0.0
        %2199 = vmatpush1.msra.mxu0 0.0
        %2200 = vmatprep.subr.mxu0 0.0
        %2201 = vmatpush1.msra.mxu0 0.0
        %2202 = vmatprep.subr.mxu0 0.0
        %2203 = vmatpush1.msra.mxu0 0.0
        %2204 = vmatprep.subr.mxu0 0.0
        %2205 = vmatpush1.msra.mxu0 0.0
        %2206 = vmatprep.subr.mxu0 0.0
        %2207 = vmatpush1.msra.mxu0 0.0
        %2208 = vmatprep.subr.mxu0 0.0
        %2209 = vmatpush1.msra.mxu0 0.0
        %2210 = vmatprep.subr.mxu0 0.0
        %2211 = vmatpush1.msra.mxu0 0.0
        %2212 = vmatprep.subr.mxu0 0.0
        %2213 = vmatpush1.msra.mxu0 0.0
        %2214 = vmatprep.subr.mxu0 0.0
        %2215 = vmatpush1.msra.mxu0 0.0
        %2216 = vmatprep.subr.mxu0 0.0
        %2217 = vmatpush1.msra.mxu0 0.0
        %2218 = vmatprep.subr.mxu0 0.0
        %2219 = vmatpush1.msra.mxu0 0.0
        %2220 = vmatprep.subr.mxu0 0.0
        %2221 = vmatpush1.msra.mxu0 0.0
        %2222 = vmatprep.subr.mxu0 0.0
        %2223 = vmatpush1.msra.mxu0 0.0
        %2224 = vmatprep.subr.mxu0 0.0
        %2225 = vmatpush1.msra.mxu0 0.0
        %2226 = vmatprep.subr.mxu0 0.0
        %2227 = vmatpush1.msra.mxu0 0.0
        %2228 = vmatprep.subr.mxu0 0.0
        %2229 = vmatpush1.msra.mxu0 0.0
        %2230 = vmatprep.mubr.f32.mxu0 0.0
        %2231 = vmatmul.mubr.f32.gmra.mrb[0].mxu0 %v2155
        %v2232 = vpop.f32.mrb[0].mxu0
        %v2233 = vadd.f32 %v2137, %v2232
        %v2234 = vpop.f32.mrb[0].mxu0
        %2235 = vmatprep.mubr.f32.mxu0 0.0
        %2236 = vmatmul.mubr.f32.gmra.mrb[0].mxu0 %v2158
        %v2237 = vpop.f32.mrb[0].mxu0
        %v2238 = vadd.f32 %v2142, %v2237
        %v2239 = vpop.f32.mrb[0].mxu0
        %2240 = vmatprep.mubr.f32.mxu0 0.0
        %2241 = vmatmul.mubr.f32.gmra.mrb[0].mxu0 %v2161
        %v2242 = vpop.f32.mrb[0].mxu0
        %v2243 = vadd.f32 %v2147, %v2242
        %v2244 = vpop.f32.mrb[0].mxu0
        %2245 = vmatprep.mubr.f32.mxu0 0.0
        %2246 = vmatmul.mubr.f32.gmra.mrb[0].mxu0 %v2164
        %v2247 = vpop.f32.mrb[0].mxu0
        %v2248 = vadd.f32 %v2152, %v2247
        %v2249 = vpop.f32.mrb[0].mxu0
        %2250 = vdwg.mxu0
        %2251 = vst [vmem:[%s283] sm:$0xff] %v2233
        %2252 = vst [vmem:[%s283 + $0x8] sm:$0xff] %v2238
        %2253 = vst [vmem:[%s283 + $0x10] sm:$0xff] %v2243
        %2254 = vst [vmem:[%s283 + $0x18] sm:$0xff] %v2248
        %s2255 = sand.u32 %s182, 1
        %s2256 = scalar_lea.sflag [#allocation3], %s2255
        %s2257 = sand.u32 %s182, 1
        %s2258 = smul.addr %s2257, 32
        %s2259 = scalar_lea.vmem [#allocation5], %s2258
        // Predicated region
        $region53: #{tpu_custom_call.1} parent=47 // pred_check
          %p2260 = pneg %p192
        $region54: #{tpu_custom_call.1} parent=47 // pred_check_branch
          %2262 = sbr.rel (%p2260) target = $region56
        $region55: #{tpu_custom_call.1} parent=47 // pred_region
          %s2264 = ssub.s32 512, 512
          %2265 = vsyncadd %s2256, %s2264
          %s2266 = smul.addr %s22, 128
          %s2267 = scalar_lea.hbm %s7, %s2266
          %s2268 = sshll.u32 %s2259, 4
          %s2269 = int_to_ptr.vmem [resolvable:$true] %s2268
          %2274 = dma.vmem_to_hbm [thread:$0]  %s2269, 512, %s2267, %s2256, 128, 256, 8
        $region56: #{tpu_custom_call.1} parent=47 // pred_fallthru
          _
      $region48: #{tpu_custom_call.1} parent=5 // pred_fallthru
        _
      %p2275 = scmp.le.s32.totalorder 2, %s17
      // Predicated region
      $region57: #{tpu_custom_call.1} parent=5 // pred_check
        %p2276 = pneg %p2275
      $region58: #{tpu_custom_call.1} parent=5 // pred_check_branch
        %2278 = sbr.rel (%p2276) target = $region60
      $region59: #{tpu_custom_call.1} parent=5 // pred_region
        %s2279 = ssub.s32 %s17, 2
        // Predicated region
        $region61: #{tpu_custom_call.1} parent=59 // pred_check
          %p2280 = pneg %p198
        $region62: #{tpu_custom_call.1} parent=59 // pred_check_branch
          %2282 = sbr.rel (%p2280) target = $region64
        $region63: #{tpu_custom_call.1} parent=59 // pred_region
          %s2283 = sand.u32 %s183, 1
          %s2284 = scalar_lea.sflag [#allocation3], %s2283
          %s2285 = sand.u32 %s183, 1
          %s2286 = smul.addr %s2285, 32
          %s2287 = scalar_lea.vmem [#allocation5], %s2286
          %2288 = dma.done %s2284, 512
        $region64: #{tpu_custom_call.1} parent=59 // pred_fallthru
          _
      $region60: #{tpu_custom_call.1} parent=5 // pred_fallthru
        _
    $region6: #{tpu_custom_call.1} parent=1 // loop_footer
      %s21 = sadd.s32 1, %s17
    $region7: #{tpu_custom_call.1} parent=1 // loop_footer_branch
      %16 = sbr.rel target = $region3
    $region8: #{tpu_custom_call.1} parent=1 // loop_exit
      _
    %2289 = vsyncpa [#allocation3], 1
    %s2290 = scalar_lea.sflag [#allocation3], 1
    %2291 = vsyncpa %s2290, 1
    %2292 = vsyncpa [#allocation4], 1
    %s2293 = scalar_lea.sflag [#allocation4], 1
    %2294 = vsyncpa %s2293, 1

</llo_original>
